<compile_context>
chip_gen: v5e
topology: v5e:2x2
jax: 0.10.0
libtpu: 0.0.40
codegen_flags: <defaults>
</compile_context>

<pallas_src>
import functools
import math

import jax
import jax.numpy as jnp
from jax.experimental import pallas as pl
from jax.experimental.pallas import tpu as pltpu

_INV_SQRT2 = 1.0 / math.sqrt(2.0)
ACT_DTYPE = jnp.bfloat16          # activation / weight storage dtype for MXU


def _pick_tile(dim, target, align):
    """Largest tile <= target that is a multiple of `align` AND divides `dim`
    evenly; falls back to the full dim (always legal for BlockSpec)."""
    if dim <= target:
        return dim
    t = (target // align) * align
    while t >= align:
        if dim % t == 0:
            return t
        t -= align
    return dim


# ----------------------------------------------------------------------------
# Tiled linear:  y = act(x @ W + b)
# ----------------------------------------------------------------------------
def _linear_kernel(x_ref, w_ref, b_ref, o_ref, acc_ref, *, activation):
    @pl.when(pl.program_id(2) == 0)
    def _init():
        acc_ref[...] = jnp.zeros_like(acc_ref)

    acc_ref[...] += jnp.dot(x_ref[...], w_ref[...],
                            preferred_element_type=jnp.float32)

    @pl.when(pl.program_id(2) == pl.num_programs(2) - 1)
    def _finalize():
        y = acc_ref[...] + b_ref[...].astype(jnp.float32)
        if activation == "gelu":              # exact (erf) GELU == nn.GELU()
            y = 0.5 * y * (1.0 + jax.lax.erf(y * _INV_SQRT2))
        o_ref[...] = y.astype(o_ref.dtype)


def linear(x, w, b, activation="none", out_dtype=ACT_DTYPE):
    """x: [M, K] bf16, w: [K, N] bf16, b: [N] f32 -> [M, N] out_dtype."""
    M, K = x.shape
    N = w.shape[1]
    tm = _pick_tile(M, 256, 16)
    tk = _pick_tile(K, 512, 128)
    tn = _pick_tile(N, 512, 128)
    return pl.pallas_call(
        functools.partial(_linear_kernel, activation=activation),
        out_shape=jax.ShapeDtypeStruct((M, N), out_dtype),
        grid=(M // tm, N // tn, K // tk),
        in_specs=[
            pl.BlockSpec((tm, tk), lambda i, j, k: (i, k)),
            pl.BlockSpec((tk, tn), lambda i, j, k: (k, j)),
            pl.BlockSpec((1, tn), lambda i, j, k: (0, j)),
        ],
        out_specs=pl.BlockSpec((tm, tn), lambda i, j, k: (i, j)),
        scratch_shapes=[pltpu.VMEM((tm, tn), jnp.float32)],
        compiler_params=pltpu.CompilerParams(
            dimension_semantics=("parallel", "parallel", "arbitrary")),
    )(x, w, b.reshape(1, N))


# ----------------------------------------------------------------------------
# Fused: y = LayerNorm(x @ W + b + residual)   (full hidden dim per tile)
# ----------------------------------------------------------------------------
def _linear_res_ln_kernel(x_ref, w_ref, b_ref, r_ref, g_ref, be_ref,
                          o_ref, acc_ref, *, eps):
    @pl.when(pl.program_id(1) == 0)
    def _init():
        acc_ref[...] = jnp.zeros_like(acc_ref)

    acc_ref[...] += jnp.dot(x_ref[...], w_ref[...],
                            preferred_element_type=jnp.float32)

    @pl.when(pl.program_id(1) == pl.num_programs(1) - 1)
    def _finalize():
        h = (acc_ref[...] + b_ref[...].astype(jnp.float32)
             + r_ref[...].astype(jnp.float32))
        mu = jnp.mean(h, axis=-1, keepdims=True)
        var = jnp.mean((h - mu) ** 2, axis=-1, keepdims=True)
        nh = (h - mu) * jax.lax.rsqrt(var + eps)
        o_ref[...] = (nh * g_ref[...].astype(jnp.float32)
                      + be_ref[...].astype(jnp.float32)).astype(o_ref.dtype)


def linear_residual_layernorm(x, w, b, residual, gamma, beta, eps,
                              out_dtype=ACT_DTYPE):
    """LayerNorm(x @ W + b + residual); x: [M, K], w: [K, N], residual: [M, N]."""
    M, K = x.shape
    N = w.shape[1]
    tm = _pick_tile(M, 256, 16)
    tk = _pick_tile(K, 512, 128)
    return pl.pallas_call(
        functools.partial(_linear_res_ln_kernel, eps=eps),
        out_shape=jax.ShapeDtypeStruct((M, N), out_dtype),
        grid=(M // tm, K // tk),
        in_specs=[
            pl.BlockSpec((tm, tk), lambda i, k: (i, k)),
            pl.BlockSpec((tk, N), lambda i, k: (k, 0)),
            pl.BlockSpec((1, N), lambda i, k: (0, 0)),
            pl.BlockSpec((tm, N), lambda i, k: (i, 0)),
            pl.BlockSpec((1, N), lambda i, k: (0, 0)),
            pl.BlockSpec((1, N), lambda i, k: (0, 0)),
        ],
        out_specs=pl.BlockSpec((tm, N), lambda i, k: (i, 0)),
        scratch_shapes=[pltpu.VMEM((tm, N), jnp.float32)],
        compiler_params=pltpu.CompilerParams(
            dimension_semantics=("parallel", "arbitrary")),
    )(x, w, b.reshape(1, N), residual, gamma.reshape(1, N), beta.reshape(1, N))


# ----------------------------------------------------------------------------
# Standalone LayerNorm (embedding output) -- no residual, row-tiled.
# ----------------------------------------------------------------------------
def _ln_kernel(x_ref, g_ref, b_ref, o_ref, *, eps):
    h = x_ref[...].astype(jnp.float32)
    mu = jnp.mean(h, axis=-1, keepdims=True)
    var = jnp.mean((h - mu) ** 2, axis=-1, keepdims=True)
    nh = (h - mu) * jax.lax.rsqrt(var + eps)
    o_ref[...] = (nh * g_ref[...] + b_ref[...]).astype(o_ref.dtype)


def layernorm(x, gamma, beta, eps, out_dtype=ACT_DTYPE):
    M, H = x.shape
    tm = _pick_tile(M, 512, 16)
    return pl.pallas_call(
        functools.partial(_ln_kernel, eps=eps),
        out_shape=jax.ShapeDtypeStruct((M, H), out_dtype),
        grid=(M // tm,),
        in_specs=[
            pl.BlockSpec((tm, H), lambda i: (i, 0)),
            pl.BlockSpec((1, H), lambda i: (0, 0)),
            pl.BlockSpec((1, H), lambda i: (0, 0)),
        ],
        out_specs=pl.BlockSpec((tm, H), lambda i: (i, 0)),
        compiler_params=pltpu.CompilerParams(dimension_semantics=("parallel",)),
    )(x, gamma.reshape(1, H), beta.reshape(1, H))


# ----------------------------------------------------------------------------
# Multi-head attention, lane-dense: one [S, 3A] block (all heads) per batch.
# ----------------------------------------------------------------------------
def _attention_kernel(qkv_ref, m_ref, o_ref, *, nh, dh, A, inv_sqrt_dh):
    qkv = qkv_ref[0]                           # [S, 3A] bf16
    mask = m_ref[0].astype(jnp.float32)        # [1, S]  additive (-10000)
    ctx_heads = []
    for h in range(nh):                        # static per-head loop
        lo = h * dh
        q = qkv[:, lo:lo + dh].astype(jnp.float32)
        k = qkv[:, A + lo:A + lo + dh].astype(jnp.float32)
        v = qkv[:, 2 * A + lo:2 * A + lo + dh]
        s = jnp.dot(q, k.T, preferred_element_type=jnp.float32) * inv_sqrt_dh
        s = s + mask
        s = s - jnp.max(s, axis=-1, keepdims=True)
        p = jnp.exp(s)
        p = p * pl.reciprocal(jnp.sum(p, axis=-1, keepdims=True), approx=True)
        ctx_heads.append(jnp.dot(p.astype(v.dtype), v,
                                 preferred_element_type=jnp.float32))
    o_ref[0] = jnp.concatenate(ctx_heads, axis=-1).astype(o_ref.dtype)


def attention(qkv3, mask3, *, nh, dh, A, out_dtype=ACT_DTYPE):
    """qkv3: [B, S, 3A] (q|k|v concatenated), mask3: [B, 1, S] -> [B, S, A]."""
    B, S, _ = qkv3.shape
    return pl.pallas_call(
        functools.partial(_attention_kernel, nh=nh, dh=dh, A=A,
                          inv_sqrt_dh=1.0 / math.sqrt(dh)),
        out_shape=jax.ShapeDtypeStruct((B, S, A), out_dtype),
        grid=(B,),
        in_specs=[
            pl.BlockSpec((1, S, 3 * A), lambda b: (b, 0, 0)),
            pl.BlockSpec((1, 1, S), lambda b: (b, 0, 0)),
        ],
        out_specs=pl.BlockSpec((1, S, A), lambda b: (b, 0, 0)),
        compiler_params=pltpu.CompilerParams(dimension_semantics=("parallel",)),
    )(qkv3, mask3)


# ----------------------------------------------------------------------------
# Fused pooler (dense + tanh on first token) + classifier -- one tiny kernel.
# ----------------------------------------------------------------------------
def _pool_cls_kernel(x_ref, wp_ref, bp_ref, wc_ref, bc_ref,
                     pooled_ref, logits_ref):
    x = x_ref[...].astype(jnp.float32)
    pooled = jnp.tanh(jnp.dot(x, wp_ref[...],
                              preferred_element_type=jnp.float32) + bp_ref[...])
    logits = jnp.dot(pooled, wc_ref[...],
                     preferred_element_type=jnp.float32) + bc_ref[...]
    pooled_ref[...] = pooled
    logits_ref[...] = logits


def pooler_classifier(first_tok, wp, bp, wc, bc):
    B, H = first_tok.shape
    L = wc.shape[1]
    return pl.pallas_call(
        _pool_cls_kernel,
        out_shape=(jax.ShapeDtypeStruct((B, H), jnp.float32),
                   jax.ShapeDtypeStruct((B, L), jnp.float32)),
        grid=(1,),
        in_specs=[
            pl.BlockSpec((B, H), lambda i: (0, 0)),
            pl.BlockSpec((H, H), lambda i: (0, 0)),
            pl.BlockSpec((1, H), lambda i: (0, 0)),
            pl.BlockSpec((H, L), lambda i: (0, 0)),
            pl.BlockSpec((1, L), lambda i: (0, 0)),
        ],
        out_specs=(pl.BlockSpec((B, H), lambda i: (0, 0)),
                   pl.BlockSpec((B, L), lambda i: (0, 0))),
    )(first_tok, wp, bp.reshape(1, H), wc, bc.reshape(1, L))


# ----------------------------------------------------------------------------
# Parameter construction (deterministic, synthetic)
# ----------------------------------------------------------------------------
def init_params(key, cfg):
    H = cfg["hidden_size"]
    A = cfg["attention_dim"]
    I = cfg["intermediate_size"]

    def dense(k, din, dout, dtype=ACT_DTYPE):
        w = 0.02 * jax.random.normal(k, (din, dout), jnp.float32)
        return w.astype(dtype), jnp.zeros((dout,), jnp.float32)

    keys = iter(jax.random.split(key, 8 * cfg["num_hidden_layers"] + 16))
    params = {
        "word_emb": 0.02 * jax.random.normal(next(keys), (cfg["vocab_size"], H), dtype=jnp.float32),
        "pos_emb": 0.02 * jax.random.normal(next(keys), (cfg["max_position"], H), dtype=jnp.float32),
        "type_emb": 0.02 * jax.random.normal(next(keys), (cfg["type_vocab_size"], H), dtype=jnp.float32),
        "emb_ln_g": jnp.ones((H,), jnp.float32),
        "emb_ln_b": jnp.zeros((H,), jnp.float32),
        "layers": [],
    }
    for _ in range(cfg["num_hidden_layers"]):
        layer = {}
        layer["qkv_w"], layer["qkv_b"] = dense(next(keys), H, 3 * A)   # fused q|k|v
        layer["ao_w"], layer["ao_b"] = dense(next(keys), A, H)
        layer["ln1_g"], layer["ln1_b"] = jnp.ones((H,), jnp.float32), jnp.zeros((H,), jnp.float32)
        layer["i_w"], layer["i_b"] = dense(next(keys), H, I)
        layer["o_w"], layer["o_b"] = dense(next(keys), I, H)
        layer["ln2_g"], layer["ln2_b"] = jnp.ones((H,), jnp.float32), jnp.zeros((H,), jnp.float32)
        params["layers"].append(layer)
    # pooler / classifier are tiny -> keep in f32
    params["pool_w"], params["pool_b"] = dense(next(keys), H, H, dtype=jnp.float32)
    params["cls_w"], params["cls_b"] = dense(next(keys), H, cfg["num_labels"], dtype=jnp.float32)
    return params


# ----------------------------------------------------------------------------
# Forward pass (= StandardBertForSequenceClassification.forward, eval mode)
# ----------------------------------------------------------------------------
def bert_forward(params, cfg, input_ids, attention_mask, token_type_ids):
    B, S = input_ids.shape
    H = cfg["hidden_size"]
    A = cfg["attention_dim"]
    dh = cfg["hidden_size"] // cfg["num_attention_heads"]   # attention_head_size
    nh = A // dh                                            # heads per layer
    eps = cfg["layer_norm_eps"]

    # extended attention mask: (1 - mask) * -10000, shape [B, 1, S]
    mask3 = (1.0 - attention_mask.astype(jnp.float32))[:, None, :] * -10000.0

    # embeddings (gathers are glue; LayerNorm runs in a Pallas kernel)
    pos_ids = jnp.arange(S, dtype=jnp.int32)
    emb = (jnp.take(params["word_emb"], input_ids, axis=0)
           + jnp.take(params["pos_emb"], pos_ids, axis=0)[None, :, :]
           + jnp.take(params["type_emb"], token_type_ids, axis=0))
    x2 = layernorm(emb.reshape(B * S, H), params["emb_ln_g"],
                   params["emb_ln_b"], eps)                 # bf16 [B*S, H]
    # TODO(synk): embedding / hidden / attention dropouts omitted (eval mode -> identity)

    for lyr in params["layers"]:
        # --- self attention (fused QKV projection, lane-dense attention) ---
        qkv = linear(x2, lyr["qkv_w"], lyr["qkv_b"])        # [B*S, 3A]
        ctx = attention(qkv.reshape(B, S, 3 * A), mask3,
                        nh=nh, dh=dh, A=A)                  # [B, S, A]
        attn_out = linear_residual_layernorm(
            ctx.reshape(B * S, A), lyr["ao_w"], lyr["ao_b"],
            x2, lyr["ln1_g"], lyr["ln1_b"], eps)            # [B*S, H]

        # --- feed forward (GELU fused into first matmul, LN fused into second) ---
        inter = linear(attn_out, lyr["i_w"], lyr["i_b"], activation="gelu")
        x2 = linear_residual_layernorm(
            inter, lyr["o_w"], lyr["o_b"],
            attn_out, lyr["ln2_g"], lyr["ln2_b"], eps)      # [B*S, H]

    last_hidden = x2.astype(jnp.float32).reshape(B, S, H)

    # pooler (first token -> dense -> tanh) + classifier, fused in one kernel
    first_tok = x2.reshape(B, S, H)[:, 0, :]
    pooled, logits = pooler_classifier(first_tok, params["pool_w"],
                                       params["pool_b"], params["cls_w"],
                                       params["cls_b"])

    return {"loss": None, "logits": logits,
            "last_hidden_state": last_hidden, "pooler_output": pooled}


# ----------------------------------------------------------------------------
if __name__ == "__main__":
    cfg = dict(
        vocab_size=50,
        hidden_size=32,
        num_attention_heads=4,     # -> attention_head_size = 8
        attention_dim=32,          # per-layer attention dim (layer_configs)
        intermediate_size=64,      # per-layer FFN dim (layer_configs)
        num_hidden_layers=2,
        max_position=16,
        type_vocab_size=2,
        layer_norm_eps=1e-12,
        num_labels=3,
    )

    key = jax.random.PRNGKey(0)
    k_param, k_ids = jax.random.split(key)
    params = init_params(k_param, cfg)

    B, S = 2, 8
    input_ids = jax.random.randint(k_ids, (B, S), 0, cfg["vocab_size"], dtype=jnp.int32)
    attention_mask = jnp.array([[1, 1, 1, 1, 1, 1, 0, 0],
                                [1, 1, 1, 1, 1, 1, 1, 1]], dtype=jnp.int32)
    token_type_ids = jnp.zeros((B, S), dtype=jnp.int32)

    fwd = jax.jit(lambda p, ids, am, tt: bert_forward(p, cfg, ids, am, tt))
    out = fwd(params, input_ids, attention_mask, token_type_ids)
    jax.block_until_ready(out["logits"])
    jax.block_until_ready(out["last_hidden_state"])
    jax.block_until_ready(out["pooler_output"])

    assert out["logits"].shape == (B, cfg["num_labels"])
    assert out["last_hidden_state"].shape == (B, S, cfg["hidden_size"])
    assert out["pooler_output"].shape == (B, cfg["hidden_size"])
    assert bool(jnp.all(jnp.isfinite(out["logits"])))
    assert bool(jnp.all(jnp.isfinite(out["last_hidden_state"])))
    print("KERNEL_OK")
</pallas_src>

<mosaic_0001>
module attributes {stable_mosaic.version = 11 : i64} {
  func.func @_ln_kernel(%arg0: i32, %arg1: memref<16x32xf32, #tpu.memory_space<vmem>>, %arg2: memref<1x32xf32, #tpu.memory_space<vmem>>, %arg3: memref<1x32xf32, #tpu.memory_space<vmem>>, %arg4: memref<16x32xbf16, #tpu.memory_space<vmem>>) attributes {dimension_semantics = [#tpu.dimension_semantics<parallel>], iteration_bounds = array<i64: 1>, scalar_prefetch = 0 : i64, scratch_operands = 0 : i64, tpu.core_type = #tpu.core_type<tc>, window_params = [{transform_indices = @transform_0, window_bounds = array<i64: 16, 32>}, {pipeline_mode = #tpu.pipeline_mode<synchronous>, transform_indices = @transform_1, window_bounds = array<i64: 1, 32>}, {pipeline_mode = #tpu.pipeline_mode<synchronous>, transform_indices = @transform_2, window_bounds = array<i64: 1, 32>}, {transform_indices = @transform_3, window_bounds = array<i64: 16, 32>}]} {
    %c0 = arith.constant 0 : index
    %c0_0 = arith.constant 0 : index
    %0 = vector.load %arg1[%c0, %c0_0] : memref<16x32xf32, #tpu.memory_space<vmem>>, vector<16x32xf32>
    %cst = arith.constant dense<0.000000e+00> : vector<16xf32>
    %1 = vector.multi_reduction <add>, %0, %cst [1] : vector<16x32xf32> to vector<16xf32>
    %2 = vector.shape_cast %1 : vector<16xf32> to vector<16x1xf32>
    %cst_1 = arith.constant 3.200000e+01 : f32
    %3 = vector.broadcast %cst_1 : f32 to vector<16x1xf32>
    %4 = arith.divf %2, %3 : vector<16x1xf32>
    %5 = vector.broadcast %4 : vector<16x1xf32> to vector<16x32xf32>
    %6 = arith.subf %0, %5 : vector<16x32xf32>
    %7 = arith.mulf %6, %6 : vector<16x32xf32>
    %cst_2 = arith.constant dense<0.000000e+00> : vector<16xf32>
    %8 = vector.multi_reduction <add>, %7, %cst_2 [1] : vector<16x32xf32> to vector<16xf32>
    %9 = vector.shape_cast %8 : vector<16xf32> to vector<16x1xf32>
    %cst_3 = arith.constant 3.200000e+01 : f32
    %10 = vector.broadcast %cst_3 : f32 to vector<16x1xf32>
    %11 = arith.divf %9, %10 : vector<16x1xf32>
    %12 = vector.broadcast %4 : vector<16x1xf32> to vector<16x32xf32>
    %13 = arith.subf %0, %12 : vector<16x32xf32>
    %cst_4 = arith.constant 9.99999996E-13 : f32
    %14 = vector.broadcast %cst_4 : f32 to vector<16x1xf32>
    %15 = arith.addf %11, %14 : vector<16x1xf32>
    %16 = math.rsqrt %15 : vector<16x1xf32>
    %17 = vector.broadcast %16 : vector<16x1xf32> to vector<16x32xf32>
    %18 = arith.mulf %13, %17 : vector<16x32xf32>
    %c0_5 = arith.constant 0 : index
    %c0_6 = arith.constant 0 : index
    %19 = vector.load %arg2[%c0_5, %c0_6] : memref<1x32xf32, #tpu.memory_space<vmem>>, vector<1x32xf32>
    %20 = vector.broadcast %19 : vector<1x32xf32> to vector<16x32xf32>
    %21 = arith.mulf %18, %20 : vector<16x32xf32>
    %c0_7 = arith.constant 0 : index
    %c0_8 = arith.constant 0 : index
    %22 = vector.load %arg3[%c0_7, %c0_8] : memref<1x32xf32, #tpu.memory_space<vmem>>, vector<1x32xf32>
    %23 = vector.broadcast %22 : vector<1x32xf32> to vector<16x32xf32>
    %24 = arith.addf %21, %23 : vector<16x32xf32>
    %25 = arith.truncf %24 : vector<16x32xf32> to vector<16x32xbf16>
    %c0_9 = arith.constant 0 : index
    %c0_10 = arith.constant 0 : index
    %26 = vector.load %arg4[%c0_9, %c0_10] : memref<16x32xbf16, #tpu.memory_space<vmem>>, vector<16x32xbf16>
    tpu.vector_store %arg4[%c0_9, %c0_10], %25 {strides = array<i32>} : memref<16x32xbf16, #tpu.memory_space<vmem>>, vector<16x32xbf16>,
    return
  }
  func.func @transform_0(%arg0: i32) -> (i32, i32) {
    %c0_i32 = arith.constant 0 : i32
    %c0_i32_0 = arith.constant 0 : i32
    return %arg0, %c0_i32 : i32, i32
  }
  func.func @transform_1(%arg0: i32) -> (i32, i32) {
    %c0_i32 = arith.constant 0 : i32
    %c0_i32_0 = arith.constant 0 : i32
    %c0_i32_1 = arith.constant 0 : i32
    return %c0_i32, %c0_i32_0 : i32, i32
  }
  func.func @transform_2(%arg0: i32) -> (i32, i32) {
    %c0_i32 = arith.constant 0 : i32
    %c0_i32_0 = arith.constant 0 : i32
    %c0_i32_1 = arith.constant 0 : i32
    return %c0_i32, %c0_i32_0 : i32, i32
  }
  func.func @transform_3(%arg0: i32) -> (i32, i32) {
    %c0_i32 = arith.constant 0 : i32
    %c0_i32_0 = arith.constant 0 : i32
    return %arg0, %c0_i32 : i32, i32
  }
}

module attributes {stable_mosaic.version = 11 : i64} {
  func.func @_linear_kernel(%arg0: i32, %arg1: i32, %arg2: i32, %arg3: memref<16x32xbf16, #tpu.memory_space<vmem>>, %arg4: memref<32x96xbf16, #tpu.memory_space<vmem>>, %arg5: memref<1x96xf32, #tpu.memory_space<vmem>>, %arg6: memref<16x96xbf16, #tpu.memory_space<vmem>>, %arg7: memref<16x96xf32, #tpu.memory_space<vmem>>) attributes {dimension_semantics = [#tpu.dimension_semantics<parallel>, #tpu.dimension_semantics<parallel>, #tpu.dimension_semantics<arbitrary>], iteration_bounds = array<i64: 1, 1, 1>, scalar_prefetch = 0 : i64, scratch_operands = 1 : i64, tpu.core_type = #tpu.core_type<tc>, window_params = [{transform_indices = @transform_0, window_bounds = array<i64: 16, 32>}, {transform_indices = @transform_1, window_bounds = array<i64: 32, 96>}, {transform_indices = @transform_2, window_bounds = array<i64: 1, 96>}, {transform_indices = @transform_3, window_bounds = array<i64: 16, 96>}]} {
    %c0_i32 = arith.constant 0 : i32
    %0 = arith.cmpi eq, %arg2, %c0_i32 : i32
    %1 = arith.extui %0 : i1 to i32
    %c0_i32_0 = arith.constant 0 : i32
    %2 = arith.cmpi ne, %1, %c0_i32_0 : i32
    scf.if %2 {
      %cst_10 = arith.constant 0.000000e+00 : f32
      %12 = vector.broadcast %cst_10 : f32 to vector<16x96xf32>
      %c0_11 = arith.constant 0 : index
      %c0_12 = arith.constant 0 : index
      %13 = vector.load %arg7[%c0_11, %c0_12] : memref<16x96xf32, #tpu.memory_space<vmem>>, vector<16x96xf32>
      tpu.vector_store %arg7[%c0_11, %c0_12], %12 {strides = array<i32>} : memref<16x96xf32, #tpu.memory_space<vmem>>, vector<16x96xf32>,
    } else {
    }
    %c0 = arith.constant 0 : index
    %c0_1 = arith.constant 0 : index
    %3 = vector.load %arg7[%c0, %c0_1] : memref<16x96xf32, #tpu.memory_space<vmem>>, vector<16x96xf32>
    %c0_2 = arith.constant 0 : index
    %c0_3 = arith.constant 0 : index
    %4 = vector.load %arg3[%c0_2, %c0_3] : memref<16x32xbf16, #tpu.memory_space<vmem>>, vector<16x32xbf16>
    %c0_4 = arith.constant 0 : index
    %c0_5 = arith.constant 0 : index
    %5 = vector.load %arg4[%c0_4, %c0_5] : memref<32x96xbf16, #tpu.memory_space<vmem>>, vector<32x96xbf16>
    %cst = arith.constant dense<0.000000e+00> : vector<16x96xf32>
    %6 = tpu.matmul %4, %5, %cst {dimension_numbers = #tpu.dot_dimension_numbers<[1], [0], [0], [1], [0, 0, 1, 1], [], []>} : vector<16x32xbf16>, vector<32x96xbf16>, vector<16x96xf32> -> vector<16x96xf32>
    %7 = arith.addf %3, %6 : vector<16x96xf32>
    %c0_6 = arith.constant 0 : index
    %c0_7 = arith.constant 0 : index
    %8 = vector.load %arg7[%c0_6, %c0_7] : memref<16x96xf32, #tpu.memory_space<vmem>>, vector<16x96xf32>
    tpu.vector_store %arg7[%c0_6, %c0_7], %7 {strides = array<i32>} : memref<16x96xf32, #tpu.memory_space<vmem>>, vector<16x96xf32>,
    %c0_i32_8 = arith.constant 0 : i32
    %9 = arith.cmpi eq, %arg2, %c0_i32_8 : i32
    %10 = arith.extui %9 : i1 to i32
    %c0_i32_9 = arith.constant 0 : i32
    %11 = arith.cmpi ne, %10, %c0_i32_9 : i32
    scf.if %11 {
      %c0_10 = arith.constant 0 : index
      %c0_11 = arith.constant 0 : index
      %12 = vector.load %arg7[%c0_10, %c0_11] : memref<16x96xf32, #tpu.memory_space<vmem>>, vector<16x96xf32>
      %c0_12 = arith.constant 0 : index
      %c0_13 = arith.constant 0 : index
      %13 = vector.load %arg5[%c0_12, %c0_13] : memref<1x96xf32, #tpu.memory_space<vmem>>, vector<1x96xf32>
      %14 = vector.broadcast %13 : vector<1x96xf32> to vector<16x96xf32>
      %15 = arith.addf %12, %14 : vector<16x96xf32>
      %16 = arith.truncf %15 : vector<16x96xf32> to vector<16x96xbf16>
      %c0_14 = arith.constant 0 : index
      %c0_15 = arith.constant 0 : index
      %17 = vector.load %arg6[%c0_14, %c0_15] : memref<16x96xbf16, #tpu.memory_space<vmem>>, vector<16x96xbf16>
      tpu.vector_store %arg6[%c0_14, %c0_15], %16 {strides = array<i32>} : memref<16x96xbf16, #tpu.memory_space<vmem>>, vector<16x96xbf16>,
    } else {
    }
    return
  }
  func.func @transform_0(%arg0: i32, %arg1: i32, %arg2: i32) -> (i32, i32) {
    %c0_i32 = arith.constant 0 : i32
    return %arg0, %arg2 : i32, i32
  }
  func.func @transform_1(%arg0: i32, %arg1: i32, %arg2: i32) -> (i32, i32) {
    %c0_i32 = arith.constant 0 : i32
    return %arg2, %arg1 : i32, i32
  }
  func.func @transform_2(%arg0: i32, %arg1: i32, %arg2: i32) -> (i32, i32) {
    %c0_i32 = arith.constant 0 : i32
    %c0_i32_0 = arith.constant 0 : i32
    return %c0_i32, %arg1 : i32, i32
  }
  func.func @transform_3(%arg0: i32, %arg1: i32, %arg2: i32) -> (i32, i32) {
    %c0_i32 = arith.constant 0 : i32
    return %arg0, %arg1 : i32, i32
  }
}

module attributes {stable_mosaic.version = 11 : i64} {
  func.func @_linear_res_ln_kernel(%arg0: i32, %arg1: i32, %arg2: memref<16x32xbf16, #tpu.memory_space<vmem>>, %arg3: memref<32x32xbf16, #tpu.memory_space<vmem>>, %arg4: memref<1x32xf32, #tpu.memory_space<vmem>>, %arg5: memref<16x32xbf16, #tpu.memory_space<vmem>>, %arg6: memref<1x32xf32, #tpu.memory_space<vmem>>, %arg7: memref<1x32xf32, #tpu.memory_space<vmem>>, %arg8: memref<16x32xbf16, #tpu.memory_space<vmem>>, %arg9: memref<16x32xf32, #tpu.memory_space<vmem>>) attributes {dimension_semantics = [#tpu.dimension_semantics<parallel>, #tpu.dimension_semantics<arbitrary>], iteration_bounds = array<i64: 1, 1>, scalar_prefetch = 0 : i64, scratch_operands = 1 : i64, tpu.core_type = #tpu.core_type<tc>, window_params = [{transform_indices = @transform_0, window_bounds = array<i64: 16, 32>}, {transform_indices = @transform_1, window_bounds = array<i64: 32, 32>}, {pipeline_mode = #tpu.pipeline_mode<synchronous>, transform_indices = @transform_2, window_bounds = array<i64: 1, 32>}, {transform_indices = @transform_3, window_bounds = array<i64: 16, 32>}, {pipeline_mode = #tpu.pipeline_mode<synchronous>, transform_indices = @transform_4, window_bounds = array<i64: 1, 32>}, {pipeline_mode = #tpu.pipeline_mode<synchronous>, transform_indices = @transform_5, window_bounds = array<i64: 1, 32>}, {transform_indices = @transform_6, window_bounds = array<i64: 16, 32>}]} {
    %c0_i32 = arith.constant 0 : i32
    %0 = arith.cmpi eq, %arg1, %c0_i32 : i32
    %1 = arith.extui %0 : i1 to i32
    %c0_i32_0 = arith.constant 0 : i32
    %2 = arith.cmpi ne, %1, %c0_i32_0 : i32
    scf.if %2 {
      %cst_10 = arith.constant 0.000000e+00 : f32
      %12 = vector.broadcast %cst_10 : f32 to vector<16x32xf32>
      %c0_11 = arith.constant 0 : index
      %c0_12 = arith.constant 0 : index
      %13 = vector.load %arg9[%c0_11, %c0_12] : memref<16x32xf32, #tpu.memory_space<vmem>>, vector<16x32xf32>
      tpu.vector_store %arg9[%c0_11, %c0_12], %12 {strides = array<i32>} : memref<16x32xf32, #tpu.memory_space<vmem>>, vector<16x32xf32>,
    } else {
    }
    %c0 = arith.constant 0 : index
    %c0_1 = arith.constant 0 : index
    %3 = vector.load %arg9[%c0, %c0_1] : memref<16x32xf32, #tpu.memory_space<vmem>>, vector<16x32xf32>
    %c0_2 = arith.constant 0 : index
    %c0_3 = arith.constant 0 : index
    %4 = vector.load %arg2[%c0_2, %c0_3] : memref<16x32xbf16, #tpu.memory_space<vmem>>, vector<16x32xbf16>
    %c0_4 = arith.constant 0 : index
    %c0_5 = arith.constant 0 : index
    %5 = vector.load %arg3[%c0_4, %c0_5] : memref<32x32xbf16, #tpu.memory_space<vmem>>, vector<32x32xbf16>
    %cst = arith.constant dense<0.000000e+00> : vector<16x32xf32>
    %6 = tpu.matmul %4, %5, %cst {dimension_numbers = #tpu.dot_dimension_numbers<[1], [0], [0], [1], [0, 0, 1, 1], [], []>} : vector<16x32xbf16>, vector<32x32xbf16>, vector<16x32xf32> -> vector<16x32xf32>
    %7 = arith.addf %3, %6 : vector<16x32xf32>
    %c0_6 = arith.constant 0 : index
    %c0_7 = arith.constant 0 : index
    %8 = vector.load %arg9[%c0_6, %c0_7] : memref<16x32xf32, #tpu.memory_space<vmem>>, vector<16x32xf32>
    tpu.vector_store %arg9[%c0_6, %c0_7], %7 {strides = array<i32>} : memref<16x32xf32, #tpu.memory_space<vmem>>, vector<16x32xf32>,
    %c0_i32_8 = arith.constant 0 : i32
    %9 = arith.cmpi eq, %arg1, %c0_i32_8 : i32
    %10 = arith.extui %9 : i1 to i32
    %c0_i32_9 = arith.constant 0 : i32
    %11 = arith.cmpi ne, %10, %c0_i32_9 : i32
    scf.if %11 {
      %c0_10 = arith.constant 0 : index
      %c0_11 = arith.constant 0 : index
      %12 = vector.load %arg9[%c0_10, %c0_11] : memref<16x32xf32, #tpu.memory_space<vmem>>, vector<16x32xf32>
      %c0_12 = arith.constant 0 : index
      %c0_13 = arith.constant 0 : index
      %13 = vector.load %arg4[%c0_12, %c0_13] : memref<1x32xf32, #tpu.memory_space<vmem>>, vector<1x32xf32>
      %14 = vector.broadcast %13 : vector<1x32xf32> to vector<16x32xf32>
      %15 = arith.addf %12, %14 : vector<16x32xf32>
      %c0_14 = arith.constant 0 : index
      %c0_15 = arith.constant 0 : index
      %16 = vector.load %arg5[%c0_14, %c0_15] : memref<16x32xbf16, #tpu.memory_space<vmem>>, vector<16x32xbf16>
      %17 = arith.extf %16 : vector<16x32xbf16> to vector<16x32xf32>
      %18 = arith.addf %15, %17 : vector<16x32xf32>
      %cst_16 = arith.constant dense<0.000000e+00> : vector<16xf32>
      %19 = vector.multi_reduction <add>, %18, %cst_16 [1] : vector<16x32xf32> to vector<16xf32>
      %20 = vector.shape_cast %19 : vector<16xf32> to vector<16x1xf32>
      %cst_17 = arith.constant 3.200000e+01 : f32
      %21 = vector.broadcast %cst_17 : f32 to vector<16x1xf32>
      %22 = arith.divf %20, %21 : vector<16x1xf32>
      %23 = vector.broadcast %22 : vector<16x1xf32> to vector<16x32xf32>
      %24 = arith.subf %18, %23 : vector<16x32xf32>
      %25 = arith.mulf %24, %24 : vector<16x32xf32>
      %cst_18 = arith.constant dense<0.000000e+00> : vector<16xf32>
      %26 = vector.multi_reduction <add>, %25, %cst_18 [1] : vector<16x32xf32> to vector<16xf32>
      %27 = vector.shape_cast %26 : vector<16xf32> to vector<16x1xf32>
      %cst_19 = arith.constant 3.200000e+01 : f32
      %28 = vector.broadcast %cst_19 : f32 to vector<16x1xf32>
      %29 = arith.divf %27, %28 : vector<16x1xf32>
      %30 = vector.broadcast %22 : vector<16x1xf32> to vector<16x32xf32>
      %31 = arith.subf %18, %30 : vector<16x32xf32>
      %cst_20 = arith.constant 9.99999996E-13 : f32
      %32 = vector.broadcast %cst_20 : f32 to vector<16x1xf32>
      %33 = arith.addf %29, %32 : vector<16x1xf32>
      %34 = math.rsqrt %33 : vector<16x1xf32>
      %35 = vector.broadcast %34 : vector<16x1xf32> to vector<16x32xf32>
      %36 = arith.mulf %31, %35 : vector<16x32xf32>
      %c0_21 = arith.constant 0 : index
      %c0_22 = arith.constant 0 : index
      %37 = vector.load %arg6[%c0_21, %c0_22] : memref<1x32xf32, #tpu.memory_space<vmem>>, vector<1x32xf32>
      %38 = vector.broadcast %37 : vector<1x32xf32> to vector<16x32xf32>
      %39 = arith.mulf %36, %38 : vector<16x32xf32>
      %c0_23 = arith.constant 0 : index
      %c0_24 = arith.constant 0 : index
      %40 = vector.load %arg7[%c0_23, %c0_24] : memref<1x32xf32, #tpu.memory_space<vmem>>, vector<1x32xf32>
      %41 = vector.broadcast %40 : vector<1x32xf32> to vector<16x32xf32>
      %42 = arith.addf %39, %41 : vector<16x32xf32>
      %43 = arith.truncf %42 : vector<16x32xf32> to vector<16x32xbf16>
      %c0_25 = arith.constant 0 : index
      %c0_26 = arith.constant 0 : index
      %44 = vector.load %arg8[%c0_25, %c0_26] : memref<16x32xbf16, #tpu.memory_space<vmem>>, vector<16x32xbf16>
      tpu.vector_store %arg8[%c0_25, %c0_26], %43 {strides = array<i32>} : memref<16x32xbf16, #tpu.memory_space<vmem>>, vector<16x32xbf16>,
    } else {
    }
    return
  }
  func.func @transform_0(%arg0: i32, %arg1: i32) -> (i32, i32) {
    %c0_i32 = arith.constant 0 : i32
    return %arg0, %arg1 : i32, i32
  }
  func.func @transform_1(%arg0: i32, %arg1: i32) -> (i32, i32) {
    %c0_i32 = arith.constant 0 : i32
    %c0_i32_0 = arith.constant 0 : i32
    return %arg1, %c0_i32 : i32, i32
  }
  func.func @transform_2(%arg0: i32, %arg1: i32) -> (i32, i32) {
    %c0_i32 = arith.constant 0 : i32
    %c0_i32_0 = arith.constant 0 : i32
    %c0_i32_1 = arith.constant 0 : i32
    return %c0_i32, %c0_i32_0 : i32, i32
  }
  func.func @transform_3(%arg0: i32, %arg1: i32) -> (i32, i32) {
    %c0_i32 = arith.constant 0 : i32
    %c0_i32_0 = arith.constant 0 : i32
    return %arg0, %c0_i32 : i32, i32
  }
  func.func @transform_4(%arg0: i32, %arg1: i32) -> (i32, i32) {
    %c0_i32 = arith.constant 0 : i32
    %c0_i32_0 = arith.constant 0 : i32
    %c0_i32_1 = arith.constant 0 : i32
    return %c0_i32, %c0_i32_0 : i32, i32
  }
  func.func @transform_5(%arg0: i32, %arg1: i32) -> (i32, i32) {
    %c0_i32 = arith.constant 0 : i32
    %c0_i32_0 = arith.constant 0 : i32
    %c0_i32_1 = arith.constant 0 : i32
    return %c0_i32, %c0_i32_0 : i32, i32
  }
  func.func @transform_6(%arg0: i32, %arg1: i32) -> (i32, i32) {
    %c0_i32 = arith.constant 0 : i32
    %c0_i32_0 = arith.constant 0 : i32
    return %arg0, %c0_i32 : i32, i32
  }
}

module attributes {stable_mosaic.version = 11 : i64} {
  func.func @_attention_kernel(%arg0: i32, %arg1: memref<1x8x96xbf16, #tpu.memory_space<vmem>>, %arg2: memref<1x1x8xf32, #tpu.memory_space<vmem>>, %arg3: memref<1x8x32xbf16, #tpu.memory_space<vmem>>) attributes {dimension_semantics = [#tpu.dimension_semantics<parallel>], iteration_bounds = array<i64: 2>, scalar_prefetch = 0 : i64, scratch_operands = 0 : i64, tpu.core_type = #tpu.core_type<tc>, window_params = [{transform_indices = @transform_0, window_bounds = array<i64: 1, 8, 96>}, {transform_indices = @transform_1, window_bounds = array<i64: 1, 1, 8>}, {transform_indices = @transform_2, window_bounds = array<i64: 1, 8, 32>}]} {
    %c0 = arith.constant 0 : index
    %c0_0 = arith.constant 0 : index
    %c0_1 = arith.constant 0 : index
    %0 = vector.load %arg1[%c0, %c0_0, %c0_1] : memref<1x8x96xbf16, #tpu.memory_space<vmem>>, vector<1x8x96xbf16>
    %1 = vector.shape_cast %0 : vector<1x8x96xbf16> to vector<8x96xbf16>
    %c0_2 = arith.constant 0 : index
    %c0_3 = arith.constant 0 : index
    %c0_4 = arith.constant 0 : index
    %2 = vector.load %arg2[%c0_2, %c0_3, %c0_4] : memref<1x1x8xf32, #tpu.memory_space<vmem>>, vector<1x1x8xf32>
    %3 = vector.shape_cast %2 : vector<1x1x8xf32> to vector<1x8xf32>
    %4 = vector.extract_strided_slice %1 {offsets = [0, 0], sizes = [8, 8], strides = [1, 1]} : vector<8x96xbf16> to vector<8x8xbf16>
    %5 = arith.extf %4 : vector<8x8xbf16> to vector<8x8xf32>
    %6 = vector.extract_strided_slice %1 {offsets = [0, 32], sizes = [8, 8], strides = [1, 1]} : vector<8x96xbf16> to vector<8x8xbf16>
    %7 = arith.extf %6 : vector<8x8xbf16> to vector<8x8xf32>
    %8 = vector.extract_strided_slice %1 {offsets = [0, 64], sizes = [8, 8], strides = [1, 1]} : vector<8x96xbf16> to vector<8x8xbf16>
    %9 = tpu.transpose %7, [1, 0] : vector<8x8xf32> -> vector<8x8xf32>
    %cst = arith.constant dense<0.000000e+00> : vector<8x8xf32>
    %10 = tpu.matmul %5, %9, %cst {dimension_numbers = #tpu.dot_dimension_numbers<[1], [0], [0], [1], [0, 0, 1, 1], [], []>} : vector<8x8xf32>, vector<8x8xf32>, vector<8x8xf32> -> vector<8x8xf32>
    %cst_5 = arith.constant 0.353553385 : f32
    %11 = vector.broadcast %cst_5 : f32 to vector<8x8xf32>
    %12 = arith.mulf %10, %11 : vector<8x8xf32>
    %13 = vector.broadcast %3 : vector<1x8xf32> to vector<8x8xf32>
    %14 = arith.addf %12, %13 : vector<8x8xf32>
    %cst_6 = arith.constant dense<0xFF800000> : vector<8xf32>
    %15 = vector.multi_reduction <maximumf>, %14, %cst_6 [1] : vector<8x8xf32> to vector<8xf32>
    %16 = vector.shape_cast %15 : vector<8xf32> to vector<8x1xf32>
    %17 = vector.broadcast %16 : vector<8x1xf32> to vector<8x8xf32>
    %18 = arith.subf %14, %17 : vector<8x8xf32>
    %19 = math.exp %18 : vector<8x8xf32>
    %cst_7 = arith.constant dense<0.000000e+00> : vector<8xf32>
    %20 = vector.multi_reduction <add>, %19, %cst_7 [1] : vector<8x8xf32> to vector<8xf32>
    %21 = vector.shape_cast %20 : vector<8xf32> to vector<8x1xf32>
    %22 = tpu.reciprocal %21 {approx = true} : vector<8x1xf32> -> vector<8x1xf32>
    %23 = vector.broadcast %22 : vector<8x1xf32> to vector<8x8xf32>
    %24 = arith.mulf %19, %23 : vector<8x8xf32>
    %25 = arith.truncf %24 : vector<8x8xf32> to vector<8x8xbf16>
    %cst_8 = arith.constant dense<0.000000e+00> : vector<8x8xf32>
    %26 = tpu.matmul %25, %8, %cst_8 {dimension_numbers = #tpu.dot_dimension_numbers<[1], [0], [0], [1], [0, 0, 1, 1], [], []>} : vector<8x8xbf16>, vector<8x8xbf16>, vector<8x8xf32> -> vector<8x8xf32>
    %27 = vector.extract_strided_slice %1 {offsets = [0, 8], sizes = [8, 8], strides = [1, 1]} : vector<8x96xbf16> to vector<8x8xbf16>
    %28 = arith.extf %27 : vector<8x8xbf16> to vector<8x8xf32>
    %29 = vector.extract_strided_slice %1 {offsets = [0, 40], sizes = [8, 8], strides = [1, 1]} : vector<8x96xbf16> to vector<8x8xbf16>
    %30 = arith.extf %29 : vector<8x8xbf16> to vector<8x8xf32>
    %31 = vector.extract_strided_slice %1 {offsets = [0, 72], sizes = [8, 8], strides = [1, 1]} : vector<8x96xbf16> to vector<8x8xbf16>
    %32 = tpu.transpose %30, [1, 0] : vector<8x8xf32> -> vector<8x8xf32>
    %cst_9 = arith.constant dense<0.000000e+00> : vector<8x8xf32>
    %33 = tpu.matmul %28, %32, %cst_9 {dimension_numbers = #tpu.dot_dimension_numbers<[1], [0], [0], [1], [0, 0, 1, 1], [], []>} : vector<8x8xf32>, vector<8x8xf32>, vector<8x8xf32> -> vector<8x8xf32>
    %cst_10 = arith.constant 0.353553385 : f32
    %34 = vector.broadcast %cst_10 : f32 to vector<8x8xf32>
    %35 = arith.mulf %33, %34 : vector<8x8xf32>
    %36 = vector.broadcast %3 : vector<1x8xf32> to vector<8x8xf32>
    %37 = arith.addf %35, %36 : vector<8x8xf32>
    %cst_11 = arith.constant dense<0xFF800000> : vector<8xf32>
    %38 = vector.multi_reduction <maximumf>, %37, %cst_11 [1] : vector<8x8xf32> to vector<8xf32>
    %39 = vector.shape_cast %38 : vector<8xf32> to vector<8x1xf32>
    %40 = vector.broadcast %39 : vector<8x1xf32> to vector<8x8xf32>
    %41 = arith.subf %37, %40 : vector<8x8xf32>
    %42 = math.exp %41 : vector<8x8xf32>
    %cst_12 = arith.constant dense<0.000000e+00> : vector<8xf32>
    %43 = vector.multi_reduction <add>, %42, %cst_12 [1] : vector<8x8xf32> to vector<8xf32>
    %44 = vector.shape_cast %43 : vector<8xf32> to vector<8x1xf32>
    %45 = tpu.reciprocal %44 {approx = true} : vector<8x1xf32> -> vector<8x1xf32>
    %46 = vector.broadcast %45 : vector<8x1xf32> to vector<8x8xf32>
    %47 = arith.mulf %42, %46 : vector<8x8xf32>
    %48 = arith.truncf %47 : vector<8x8xf32> to vector<8x8xbf16>
    %cst_13 = arith.constant dense<0.000000e+00> : vector<8x8xf32>
    %49 = tpu.matmul %48, %31, %cst_13 {dimension_numbers = #tpu.dot_dimension_numbers<[1], [0], [0], [1], [0, 0, 1, 1], [], []>} : vector<8x8xbf16>, vector<8x8xbf16>, vector<8x8xf32> -> vector<8x8xf32>
    %50 = vector.extract_strided_slice %1 {offsets = [0, 16], sizes = [8, 8], strides = [1, 1]} : vector<8x96xbf16> to vector<8x8xbf16>
    %51 = arith.extf %50 : vector<8x8xbf16> to vector<8x8xf32>
    %52 = vector.extract_strided_slice %1 {offsets = [0, 48], sizes = [8, 8], strides = [1, 1]} : vector<8x96xbf16> to vector<8x8xbf16>
    %53 = arith.extf %52 : vector<8x8xbf16> to vector<8x8xf32>
    %54 = vector.extract_strided_slice %1 {offsets = [0, 80], sizes = [8, 8], strides = [1, 1]} : vector<8x96xbf16> to vector<8x8xbf16>
    %55 = tpu.transpose %53, [1, 0] : vector<8x8xf32> -> vector<8x8xf32>
    %cst_14 = arith.constant dense<0.000000e+00> : vector<8x8xf32>
    %56 = tpu.matmul %51, %55, %cst_14 {dimension_numbers = #tpu.dot_dimension_numbers<[1], [0], [0], [1], [0, 0, 1, 1], [], []>} : vector<8x8xf32>, vector<8x8xf32>, vector<8x8xf32> -> vector<8x8xf32>
    %cst_15 = arith.constant 0.353553385 : f32
    %57 = vector.broadcast %cst_15 : f32 to vector<8x8xf32>
    %58 = arith.mulf %56, %57 : vector<8x8xf32>
    %59 = vector.broadcast %3 : vector<1x8xf32> to vector<8x8xf32>
    %60 = arith.addf %58, %59 : vector<8x8xf32>
    %cst_16 = arith.constant dense<0xFF800000> : vector<8xf32>
    %61 = vector.multi_reduction <maximumf>, %60, %cst_16 [1] : vector<8x8xf32> to vector<8xf32>
    %62 = vector.shape_cast %61 : vector<8xf32> to vector<8x1xf32>
    %63 = vector.broadcast %62 : vector<8x1xf32> to vector<8x8xf32>
    %64 = arith.subf %60, %63 : vector<8x8xf32>
    %65 = math.exp %64 : vector<8x8xf32>
    %cst_17 = arith.constant dense<0.000000e+00> : vector<8xf32>
    %66 = vector.multi_reduction <add>, %65, %cst_17 [1] : vector<8x8xf32> to vector<8xf32>
    %67 = vector.shape_cast %66 : vector<8xf32> to vector<8x1xf32>
    %68 = tpu.reciprocal %67 {approx = true} : vector<8x1xf32> -> vector<8x1xf32>
    %69 = vector.broadcast %68 : vector<8x1xf32> to vector<8x8xf32>
    %70 = arith.mulf %65, %69 : vector<8x8xf32>
    %71 = arith.truncf %70 : vector<8x8xf32> to vector<8x8xbf16>
    %cst_18 = arith.constant dense<0.000000e+00> : vector<8x8xf32>
    %72 = tpu.matmul %71, %54, %cst_18 {dimension_numbers = #tpu.dot_dimension_numbers<[1], [0], [0], [1], [0, 0, 1, 1], [], []>} : vector<8x8xbf16>, vector<8x8xbf16>, vector<8x8xf32> -> vector<8x8xf32>
    %73 = vector.extract_strided_slice %1 {offsets = [0, 24], sizes = [8, 8], strides = [1, 1]} : vector<8x96xbf16> to vector<8x8xbf16>
    %74 = arith.extf %73 : vector<8x8xbf16> to vector<8x8xf32>
    %75 = vector.extract_strided_slice %1 {offsets = [0, 56], sizes = [8, 8], strides = [1, 1]} : vector<8x96xbf16> to vector<8x8xbf16>
    %76 = arith.extf %75 : vector<8x8xbf16> to vector<8x8xf32>
    %77 = vector.extract_strided_slice %1 {offsets = [0, 88], sizes = [8, 8], strides = [1, 1]} : vector<8x96xbf16> to vector<8x8xbf16>
    %78 = tpu.transpose %76, [1, 0] : vector<8x8xf32> -> vector<8x8xf32>
    %cst_19 = arith.constant dense<0.000000e+00> : vector<8x8xf32>
    %79 = tpu.matmul %74, %78, %cst_19 {dimension_numbers = #tpu.dot_dimension_numbers<[1], [0], [0], [1], [0, 0, 1, 1], [], []>} : vector<8x8xf32>, vector<8x8xf32>, vector<8x8xf32> -> vector<8x8xf32>
    %cst_20 = arith.constant 0.353553385 : f32
    %80 = vector.broadcast %cst_20 : f32 to vector<8x8xf32>
    %81 = arith.mulf %79, %80 : vector<8x8xf32>
    %82 = vector.broadcast %3 : vector<1x8xf32> to vector<8x8xf32>
    %83 = arith.addf %81, %82 : vector<8x8xf32>
    %cst_21 = arith.constant dense<0xFF800000> : vector<8xf32>
    %84 = vector.multi_reduction <maximumf>, %83, %cst_21 [1] : vector<8x8xf32> to vector<8xf32>
    %85 = vector.shape_cast %84 : vector<8xf32> to vector<8x1xf32>
    %86 = vector.broadcast %85 : vector<8x1xf32> to vector<8x8xf32>
    %87 = arith.subf %83, %86 : vector<8x8xf32>
    %88 = math.exp %87 : vector<8x8xf32>
    %cst_22 = arith.constant dense<0.000000e+00> : vector<8xf32>
    %89 = vector.multi_reduction <add>, %88, %cst_22 [1] : vector<8x8xf32> to vector<8xf32>
    %90 = vector.shape_cast %89 : vector<8xf32> to vector<8x1xf32>
    %91 = tpu.reciprocal %90 {approx = true} : vector<8x1xf32> -> vector<8x1xf32>
    %92 = vector.broadcast %91 : vector<8x1xf32> to vector<8x8xf32>
    %93 = arith.mulf %88, %92 : vector<8x8xf32>
    %94 = arith.truncf %93 : vector<8x8xf32> to vector<8x8xbf16>
    %cst_23 = arith.constant dense<0.000000e+00> : vector<8x8xf32>
    %95 = tpu.matmul %94, %77, %cst_23 {dimension_numbers = #tpu.dot_dimension_numbers<[1], [0], [0], [1], [0, 0, 1, 1], [], []>} : vector<8x8xbf16>, vector<8x8xbf16>, vector<8x8xf32> -> vector<8x8xf32>
    %96 = tpu.concatenate %26, %49, %72, %95 in 1 : vector<8x8xf32>, vector<8x8xf32>, vector<8x8xf32>, vector<8x8xf32> -> vector<8x32xf32>
    %97 = arith.truncf %96 : vector<8x32xf32> to vector<8x32xbf16>
    %c0_24 = arith.constant 0 : index
    %c0_25 = arith.constant 0 : index
    %c0_26 = arith.constant 0 : index
    %98 = vector.load %arg3[%c0_24, %c0_25, %c0_26] : memref<1x8x32xbf16, #tpu.memory_space<vmem>>, vector<1x8x32xbf16>
    %99 = vector.shape_cast %98 : vector<1x8x32xbf16> to vector<8x32xbf16>
    %100 = vector.shape_cast %97 : vector<8x32xbf16> to vector<1x8x32xbf16>
    tpu.vector_store %arg3[%c0_24, %c0_25, %c0_26], %100 {strides = array<i32>} : memref<1x8x32xbf16, #tpu.memory_space<vmem>>, vector<1x8x32xbf16>,
    return
  }
  func.func @transform_0(%arg0: i32) -> (i32, i32, i32) {
    %c0_i32 = arith.constant 0 : i32
    %c0_i32_0 = arith.constant 0 : i32
    %c0_i32_1 = arith.constant 0 : i32
    return %arg0, %c0_i32, %c0_i32_0 : i32, i32, i32
  }
  func.func @transform_1(%arg0: i32) -> (i32, i32, i32) {
    %c0_i32 = arith.constant 0 : i32
    %c0_i32_0 = arith.constant 0 : i32
    %c0_i32_1 = arith.constant 0 : i32
    return %arg0, %c0_i32, %c0_i32_0 : i32, i32, i32
  }
  func.func @transform_2(%arg0: i32) -> (i32, i32, i32) {
    %c0_i32 = arith.constant 0 : i32
    %c0_i32_0 = arith.constant 0 : i32
    %c0_i32_1 = arith.constant 0 : i32
    return %arg0, %c0_i32, %c0_i32_0 : i32, i32, i32
  }
}

module attributes {stable_mosaic.version = 11 : i64} {
  func.func @_linear_kernel(%arg0: i32, %arg1: i32, %arg2: i32, %arg3: memref<16x32xbf16, #tpu.memory_space<vmem>>, %arg4: memref<32x64xbf16, #tpu.memory_space<vmem>>, %arg5: memref<1x64xf32, #tpu.memory_space<vmem>>, %arg6: memref<16x64xbf16, #tpu.memory_space<vmem>>, %arg7: memref<16x64xf32, #tpu.memory_space<vmem>>) attributes {dimension_semantics = [#tpu.dimension_semantics<parallel>, #tpu.dimension_semantics<parallel>, #tpu.dimension_semantics<arbitrary>], iteration_bounds = array<i64: 1, 1, 1>, scalar_prefetch = 0 : i64, scratch_operands = 1 : i64, tpu.core_type = #tpu.core_type<tc>, window_params = [{transform_indices = @transform_0, window_bounds = array<i64: 16, 32>}, {transform_indices = @transform_1, window_bounds = array<i64: 32, 64>}, {transform_indices = @transform_2, window_bounds = array<i64: 1, 64>}, {transform_indices = @transform_3, window_bounds = array<i64: 16, 64>}]} {
    %c0_i32 = arith.constant 0 : i32
    %0 = arith.cmpi eq, %arg2, %c0_i32 : i32
    %1 = arith.extui %0 : i1 to i32
    %c0_i32_0 = arith.constant 0 : i32
    %2 = arith.cmpi ne, %1, %c0_i32_0 : i32
    scf.if %2 {
      %cst_10 = arith.constant 0.000000e+00 : f32
      %12 = vector.broadcast %cst_10 : f32 to vector<16x64xf32>
      %c0_11 = arith.constant 0 : index
      %c0_12 = arith.constant 0 : index
      %13 = vector.load %arg7[%c0_11, %c0_12] : memref<16x64xf32, #tpu.memory_space<vmem>>, vector<16x64xf32>
      tpu.vector_store %arg7[%c0_11, %c0_12], %12 {strides = array<i32>} : memref<16x64xf32, #tpu.memory_space<vmem>>, vector<16x64xf32>,
    } else {
    }
    %c0 = arith.constant 0 : index
    %c0_1 = arith.constant 0 : index
    %3 = vector.load %arg7[%c0, %c0_1] : memref<16x64xf32, #tpu.memory_space<vmem>>, vector<16x64xf32>
    %c0_2 = arith.constant 0 : index
    %c0_3 = arith.constant 0 : index
    %4 = vector.load %arg3[%c0_2, %c0_3] : memref<16x32xbf16, #tpu.memory_space<vmem>>, vector<16x32xbf16>
    %c0_4 = arith.constant 0 : index
    %c0_5 = arith.constant 0 : index
    %5 = vector.load %arg4[%c0_4, %c0_5] : memref<32x64xbf16, #tpu.memory_space<vmem>>, vector<32x64xbf16>
    %cst = arith.constant dense<0.000000e+00> : vector<16x64xf32>
    %6 = tpu.matmul %4, %5, %cst {dimension_numbers = #tpu.dot_dimension_numbers<[1], [0], [0], [1], [0, 0, 1, 1], [], []>} : vector<16x32xbf16>, vector<32x64xbf16>, vector<16x64xf32> -> vector<16x64xf32>
    %7 = arith.addf %3, %6 : vector<16x64xf32>
    %c0_6 = arith.constant 0 : index
    %c0_7 = arith.constant 0 : index
    %8 = vector.load %arg7[%c0_6, %c0_7] : memref<16x64xf32, #tpu.memory_space<vmem>>, vector<16x64xf32>
    tpu.vector_store %arg7[%c0_6, %c0_7], %7 {strides = array<i32>} : memref<16x64xf32, #tpu.memory_space<vmem>>, vector<16x64xf32>,
    %c0_i32_8 = arith.constant 0 : i32
    %9 = arith.cmpi eq, %arg2, %c0_i32_8 : i32
    %10 = arith.extui %9 : i1 to i32
    %c0_i32_9 = arith.constant 0 : i32
    %11 = arith.cmpi ne, %10, %c0_i32_9 : i32
    scf.if %11 {
      %c0_10 = arith.constant 0 : index
      %c0_11 = arith.constant 0 : index
      %12 = vector.load %arg7[%c0_10, %c0_11] : memref<16x64xf32, #tpu.memory_space<vmem>>, vector<16x64xf32>
      %c0_12 = arith.constant 0 : index
      %c0_13 = arith.constant 0 : index
      %13 = vector.load %arg5[%c0_12, %c0_13] : memref<1x64xf32, #tpu.memory_space<vmem>>, vector<1x64xf32>
      %14 = vector.broadcast %13 : vector<1x64xf32> to vector<16x64xf32>
      %15 = arith.addf %12, %14 : vector<16x64xf32>
      %cst_14 = arith.constant 5.000000e-01 : f32
      %16 = vector.broadcast %cst_14 : f32 to vector<16x64xf32>
      %17 = arith.mulf %16, %15 : vector<16x64xf32>
      %cst_15 = arith.constant 0.707106769 : f32
      %18 = vector.broadcast %cst_15 : f32 to vector<16x64xf32>
      %19 = arith.mulf %15, %18 : vector<16x64xf32>
      %20 = math.erf %19 : vector<16x64xf32>
      %cst_16 = arith.constant 1.000000e+00 : f32
      %21 = vector.broadcast %cst_16 : f32 to vector<16x64xf32>
      %22 = arith.addf %21, %20 : vector<16x64xf32>
      %23 = arith.mulf %17, %22 : vector<16x64xf32>
      %24 = arith.truncf %23 : vector<16x64xf32> to vector<16x64xbf16>
      %c0_17 = arith.constant 0 : index
      %c0_18 = arith.constant 0 : index
      %25 = vector.load %arg6[%c0_17, %c0_18] : memref<16x64xbf16, #tpu.memory_space<vmem>>, vector<16x64xbf16>
      tpu.vector_store %arg6[%c0_17, %c0_18], %24 {strides = array<i32>} : memref<16x64xbf16, #tpu.memory_space<vmem>>, vector<16x64xbf16>,
    } else {
    }
    return
  }
  func.func @transform_0(%arg0: i32, %arg1: i32, %arg2: i32) -> (i32, i32) {
    %c0_i32 = arith.constant 0 : i32
    return %arg0, %arg2 : i32, i32
  }
  func.func @transform_1(%arg0: i32, %arg1: i32, %arg2: i32) -> (i32, i32) {
    %c0_i32 = arith.constant 0 : i32
    return %arg2, %arg1 : i32, i32
  }
  func.func @transform_2(%arg0: i32, %arg1: i32, %arg2: i32) -> (i32, i32) {
    %c0_i32 = arith.constant 0 : i32
    %c0_i32_0 = arith.constant 0 : i32
    return %c0_i32, %arg1 : i32, i32
  }
  func.func @transform_3(%arg0: i32, %arg1: i32, %arg2: i32) -> (i32, i32) {
    %c0_i32 = arith.constant 0 : i32
    return %arg0, %arg1 : i32, i32
  }
}

module attributes {stable_mosaic.version = 11 : i64} {
  func.func @_linear_res_ln_kernel(%arg0: i32, %arg1: i32, %arg2: memref<16x64xbf16, #tpu.memory_space<vmem>>, %arg3: memref<64x32xbf16, #tpu.memory_space<vmem>>, %arg4: memref<1x32xf32, #tpu.memory_space<vmem>>, %arg5: memref<16x32xbf16, #tpu.memory_space<vmem>>, %arg6: memref<1x32xf32, #tpu.memory_space<vmem>>, %arg7: memref<1x32xf32, #tpu.memory_space<vmem>>, %arg8: memref<16x32xbf16, #tpu.memory_space<vmem>>, %arg9: memref<16x32xf32, #tpu.memory_space<vmem>>) attributes {dimension_semantics = [#tpu.dimension_semantics<parallel>, #tpu.dimension_semantics<arbitrary>], iteration_bounds = array<i64: 1, 1>, scalar_prefetch = 0 : i64, scratch_operands = 1 : i64, tpu.core_type = #tpu.core_type<tc>, window_params = [{transform_indices = @transform_0, window_bounds = array<i64: 16, 64>}, {transform_indices = @transform_1, window_bounds = array<i64: 64, 32>}, {pipeline_mode = #tpu.pipeline_mode<synchronous>, transform_indices = @transform_2, window_bounds = array<i64: 1, 32>}, {transform_indices = @transform_3, window_bounds = array<i64: 16, 32>}, {pipeline_mode = #tpu.pipeline_mode<synchronous>, transform_indices = @transform_4, window_bounds = array<i64: 1, 32>}, {pipeline_mode = #tpu.pipeline_mode<synchronous>, transform_indices = @transform_5, window_bounds = array<i64: 1, 32>}, {transform_indices = @transform_6, window_bounds = array<i64: 16, 32>}]} {
    %c0_i32 = arith.constant 0 : i32
    %0 = arith.cmpi eq, %arg1, %c0_i32 : i32
    %1 = arith.extui %0 : i1 to i32
    %c0_i32_0 = arith.constant 0 : i32
    %2 = arith.cmpi ne, %1, %c0_i32_0 : i32
    scf.if %2 {
      %cst_10 = arith.constant 0.000000e+00 : f32
      %12 = vector.broadcast %cst_10 : f32 to vector<16x32xf32>
      %c0_11 = arith.constant 0 : index
      %c0_12 = arith.constant 0 : index
      %13 = vector.load %arg9[%c0_11, %c0_12] : memref<16x32xf32, #tpu.memory_space<vmem>>, vector<16x32xf32>
      tpu.vector_store %arg9[%c0_11, %c0_12], %12 {strides = array<i32>} : memref<16x32xf32, #tpu.memory_space<vmem>>, vector<16x32xf32>,
    } else {
    }
    %c0 = arith.constant 0 : index
    %c0_1 = arith.constant 0 : index
    %3 = vector.load %arg9[%c0, %c0_1] : memref<16x32xf32, #tpu.memory_space<vmem>>, vector<16x32xf32>
    %c0_2 = arith.constant 0 : index
    %c0_3 = arith.constant 0 : index
    %4 = vector.load %arg2[%c0_2, %c0_3] : memref<16x64xbf16, #tpu.memory_space<vmem>>, vector<16x64xbf16>
    %c0_4 = arith.constant 0 : index
    %c0_5 = arith.constant 0 : index
    %5 = vector.load %arg3[%c0_4, %c0_5] : memref<64x32xbf16, #tpu.memory_space<vmem>>, vector<64x32xbf16>
    %cst = arith.constant dense<0.000000e+00> : vector<16x32xf32>
    %6 = tpu.matmul %4, %5, %cst {dimension_numbers = #tpu.dot_dimension_numbers<[1], [0], [0], [1], [0, 0, 1, 1], [], []>} : vector<16x64xbf16>, vector<64x32xbf16>, vector<16x32xf32> -> vector<16x32xf32>
    %7 = arith.addf %3, %6 : vector<16x32xf32>
    %c0_6 = arith.constant 0 : index
    %c0_7 = arith.constant 0 : index
    %8 = vector.load %arg9[%c0_6, %c0_7] : memref<16x32xf32, #tpu.memory_space<vmem>>, vector<16x32xf32>
    tpu.vector_store %arg9[%c0_6, %c0_7], %7 {strides = array<i32>} : memref<16x32xf32, #tpu.memory_space<vmem>>, vector<16x32xf32>,
    %c0_i32_8 = arith.constant 0 : i32
    %9 = arith.cmpi eq, %arg1, %c0_i32_8 : i32
    %10 = arith.extui %9 : i1 to i32
    %c0_i32_9 = arith.constant 0 : i32
    %11 = arith.cmpi ne, %10, %c0_i32_9 : i32
    scf.if %11 {
      %c0_10 = arith.constant 0 : index
      %c0_11 = arith.constant 0 : index
      %12 = vector.load %arg9[%c0_10, %c0_11] : memref<16x32xf32, #tpu.memory_space<vmem>>, vector<16x32xf32>
      %c0_12 = arith.constant 0 : index
      %c0_13 = arith.constant 0 : index
      %13 = vector.load %arg4[%c0_12, %c0_13] : memref<1x32xf32, #tpu.memory_space<vmem>>, vector<1x32xf32>
      %14 = vector.broadcast %13 : vector<1x32xf32> to vector<16x32xf32>
      %15 = arith.addf %12, %14 : vector<16x32xf32>
      %c0_14 = arith.constant 0 : index
      %c0_15 = arith.constant 0 : index
      %16 = vector.load %arg5[%c0_14, %c0_15] : memref<16x32xbf16, #tpu.memory_space<vmem>>, vector<16x32xbf16>
      %17 = arith.extf %16 : vector<16x32xbf16> to vector<16x32xf32>
      %18 = arith.addf %15, %17 : vector<16x32xf32>
      %cst_16 = arith.constant dense<0.000000e+00> : vector<16xf32>
      %19 = vector.multi_reduction <add>, %18, %cst_16 [1] : vector<16x32xf32> to vector<16xf32>
      %20 = vector.shape_cast %19 : vector<16xf32> to vector<16x1xf32>
      %cst_17 = arith.constant 3.200000e+01 : f32
      %21 = vector.broadcast %cst_17 : f32 to vector<16x1xf32>
      %22 = arith.divf %20, %21 : vector<16x1xf32>
      %23 = vector.broadcast %22 : vector<16x1xf32> to vector<16x32xf32>
      %24 = arith.subf %18, %23 : vector<16x32xf32>
      %25 = arith.mulf %24, %24 : vector<16x32xf32>
      %cst_18 = arith.constant dense<0.000000e+00> : vector<16xf32>
      %26 = vector.multi_reduction <add>, %25, %cst_18 [1] : vector<16x32xf32> to vector<16xf32>
      %27 = vector.shape_cast %26 : vector<16xf32> to vector<16x1xf32>
      %cst_19 = arith.constant 3.200000e+01 : f32
      %28 = vector.broadcast %cst_19 : f32 to vector<16x1xf32>
      %29 = arith.divf %27, %28 : vector<16x1xf32>
      %30 = vector.broadcast %22 : vector<16x1xf32> to vector<16x32xf32>
      %31 = arith.subf %18, %30 : vector<16x32xf32>
      %cst_20 = arith.constant 9.99999996E-13 : f32
      %32 = vector.broadcast %cst_20 : f32 to vector<16x1xf32>
      %33 = arith.addf %29, %32 : vector<16x1xf32>
      %34 = math.rsqrt %33 : vector<16x1xf32>
      %35 = vector.broadcast %34 : vector<16x1xf32> to vector<16x32xf32>
      %36 = arith.mulf %31, %35 : vector<16x32xf32>
      %c0_21 = arith.constant 0 : index
      %c0_22 = arith.constant 0 : index
      %37 = vector.load %arg6[%c0_21, %c0_22] : memref<1x32xf32, #tpu.memory_space<vmem>>, vector<1x32xf32>
      %38 = vector.broadcast %37 : vector<1x32xf32> to vector<16x32xf32>
      %39 = arith.mulf %36, %38 : vector<16x32xf32>
      %c0_23 = arith.constant 0 : index
      %c0_24 = arith.constant 0 : index
      %40 = vector.load %arg7[%c0_23, %c0_24] : memref<1x32xf32, #tpu.memory_space<vmem>>, vector<1x32xf32>
      %41 = vector.broadcast %40 : vector<1x32xf32> to vector<16x32xf32>
      %42 = arith.addf %39, %41 : vector<16x32xf32>
      %43 = arith.truncf %42 : vector<16x32xf32> to vector<16x32xbf16>
      %c0_25 = arith.constant 0 : index
      %c0_26 = arith.constant 0 : index
      %44 = vector.load %arg8[%c0_25, %c0_26] : memref<16x32xbf16, #tpu.memory_space<vmem>>, vector<16x32xbf16>
      tpu.vector_store %arg8[%c0_25, %c0_26], %43 {strides = array<i32>} : memref<16x32xbf16, #tpu.memory_space<vmem>>, vector<16x32xbf16>,
    } else {
    }
    return
  }
  func.func @transform_0(%arg0: i32, %arg1: i32) -> (i32, i32) {
    %c0_i32 = arith.constant 0 : i32
    return %arg0, %arg1 : i32, i32
  }
  func.func @transform_1(%arg0: i32, %arg1: i32) -> (i32, i32) {
    %c0_i32 = arith.constant 0 : i32
    %c0_i32_0 = arith.constant 0 : i32
    return %arg1, %c0_i32 : i32, i32
  }
  func.func @transform_2(%arg0: i32, %arg1: i32) -> (i32, i32) {
    %c0_i32 = arith.constant 0 : i32
    %c0_i32_0 = arith.constant 0 : i32
    %c0_i32_1 = arith.constant 0 : i32
    return %c0_i32, %c0_i32_0 : i32, i32
  }
  func.func @transform_3(%arg0: i32, %arg1: i32) -> (i32, i32) {
    %c0_i32 = arith.constant 0 : i32
    %c0_i32_0 = arith.constant 0 : i32
    return %arg0, %c0_i32 : i32, i32
  }
  func.func @transform_4(%arg0: i32, %arg1: i32) -> (i32, i32) {
    %c0_i32 = arith.constant 0 : i32
    %c0_i32_0 = arith.constant 0 : i32
    %c0_i32_1 = arith.constant 0 : i32
    return %c0_i32, %c0_i32_0 : i32, i32
  }
  func.func @transform_5(%arg0: i32, %arg1: i32) -> (i32, i32) {
    %c0_i32 = arith.constant 0 : i32
    %c0_i32_0 = arith.constant 0 : i32
    %c0_i32_1 = arith.constant 0 : i32
    return %c0_i32, %c0_i32_0 : i32, i32
  }
  func.func @transform_6(%arg0: i32, %arg1: i32) -> (i32, i32) {
    %c0_i32 = arith.constant 0 : i32
    %c0_i32_0 = arith.constant 0 : i32
    return %arg0, %c0_i32 : i32, i32
  }
}

module attributes {stable_mosaic.version = 11 : i64} {
  func.func @_pool_cls_kernel(%arg0: i32, %arg1: memref<2x32xbf16, #tpu.memory_space<vmem>>, %arg2: memref<32x32xf32, #tpu.memory_space<vmem>>, %arg3: memref<1x32xf32, #tpu.memory_space<vmem>>, %arg4: memref<32x3xf32, #tpu.memory_space<vmem>>, %arg5: memref<1x3xf32, #tpu.memory_space<vmem>>, %arg6: memref<2x32xf32, #tpu.memory_space<vmem>>, %arg7: memref<2x3xf32, #tpu.memory_space<vmem>>) attributes {dimension_semantics = [#tpu.dimension_semantics<arbitrary>], iteration_bounds = array<i64: 1>, scalar_prefetch = 0 : i64, scratch_operands = 0 : i64, tpu.core_type = #tpu.core_type<tc>, window_params = [{pipeline_mode = #tpu.pipeline_mode<synchronous>, transform_indices = @transform_0, window_bounds = array<i64: 2, 32>}, {pipeline_mode = #tpu.pipeline_mode<synchronous>, transform_indices = @transform_1, window_bounds = array<i64: 32, 32>}, {pipeline_mode = #tpu.pipeline_mode<synchronous>, transform_indices = @transform_2, window_bounds = array<i64: 1, 32>}, {pipeline_mode = #tpu.pipeline_mode<synchronous>, transform_indices = @transform_3, window_bounds = array<i64: 32, 3>}, {pipeline_mode = #tpu.pipeline_mode<synchronous>, transform_indices = @transform_4, window_bounds = array<i64: 1, 3>}, {pipeline_mode = #tpu.pipeline_mode<synchronous>, transform_indices = @transform_5, window_bounds = array<i64: 2, 32>}, {pipeline_mode = #tpu.pipeline_mode<synchronous>, transform_indices = @transform_6, window_bounds = array<i64: 2, 3>}]} {
    %c0 = arith.constant 0 : index
    %c0_0 = arith.constant 0 : index
    %0 = vector.load %arg1[%c0, %c0_0] : memref<2x32xbf16, #tpu.memory_space<vmem>>, vector<2x32xbf16>
    %1 = arith.extf %0 : vector<2x32xbf16> to vector<2x32xf32>
    %c0_1 = arith.constant 0 : index
    %c0_2 = arith.constant 0 : index
    %2 = vector.load %arg2[%c0_1, %c0_2] : memref<32x32xf32, #tpu.memory_space<vmem>>, vector<32x32xf32>
    %cst = arith.constant dense<0.000000e+00> : vector<2x32xf32>
    %3 = tpu.matmul %1, %2, %cst {dimension_numbers = #tpu.dot_dimension_numbers<[1], [0], [0], [1], [0, 0, 1, 1], [], []>} : vector<2x32xf32>, vector<32x32xf32>, vector<2x32xf32> -> vector<2x32xf32>
    %c0_3 = arith.constant 0 : index
    %c0_4 = arith.constant 0 : index
    %4 = vector.load %arg3[%c0_3, %c0_4] : memref<1x32xf32, #tpu.memory_space<vmem>>, vector<1x32xf32>
    %5 = vector.broadcast %4 : vector<1x32xf32> to vector<2x32xf32>
    %6 = arith.addf %3, %5 : vector<2x32xf32>
    %7 = math.tanh %6 : vector<2x32xf32>
    %c0_5 = arith.constant 0 : index
    %c0_6 = arith.constant 0 : index
    %8 = vector.load %arg4[%c0_5, %c0_6] : memref<32x3xf32, #tpu.memory_space<vmem>>, vector<32x3xf32>
    %cst_7 = arith.constant dense<0.000000e+00> : vector<2x3xf32>
    %9 = tpu.matmul %7, %8, %cst_7 {dimension_numbers = #tpu.dot_dimension_numbers<[1], [0], [0], [1], [0, 0, 1, 1], [], []>} : vector<2x32xf32>, vector<32x3xf32>, vector<2x3xf32> -> vector<2x3xf32>
    %c0_8 = arith.constant 0 : index
    %c0_9 = arith.constant 0 : index
    %10 = vector.load %arg5[%c0_8, %c0_9] : memref<1x3xf32, #tpu.memory_space<vmem>>, vector<1x3xf32>
    %11 = vector.broadcast %10 : vector<1x3xf32> to vector<2x3xf32>
    %12 = arith.addf %9, %11 : vector<2x3xf32>
    %c0_10 = arith.constant 0 : index
    %c0_11 = arith.constant 0 : index
    %13 = vector.load %arg6[%c0_10, %c0_11] : memref<2x32xf32, #tpu.memory_space<vmem>>, vector<2x32xf32>
    tpu.vector_store %arg6[%c0_10, %c0_11], %7 {strides = array<i32>} : memref<2x32xf32, #tpu.memory_space<vmem>>, vector<2x32xf32>,
    %c0_12 = arith.constant 0 : index
    %c0_13 = arith.constant 0 : index
    %14 = vector.load %arg7[%c0_12, %c0_13] : memref<2x3xf32, #tpu.memory_space<vmem>>, vector<2x3xf32>
    tpu.vector_store %arg7[%c0_12, %c0_13], %12 {strides = array<i32>} : memref<2x3xf32, #tpu.memory_space<vmem>>, vector<2x3xf32>,
    return
  }
  func.func @transform_0(%arg0: i32) -> (i32, i32) {
    %c0_i32 = arith.constant 0 : i32
    %c0_i32_0 = arith.constant 0 : i32
    %c0_i32_1 = arith.constant 0 : i32
    return %c0_i32, %c0_i32_0 : i32, i32
  }
  func.func @transform_1(%arg0: i32) -> (i32, i32) {
    %c0_i32 = arith.constant 0 : i32
    %c0_i32_0 = arith.constant 0 : i32
    %c0_i32_1 = arith.constant 0 : i32
    return %c0_i32, %c0_i32_0 : i32, i32
  }
  func.func @transform_2(%arg0: i32) -> (i32, i32) {
    %c0_i32 = arith.constant 0 : i32
    %c0_i32_0 = arith.constant 0 : i32
    %c0_i32_1 = arith.constant 0 : i32
    return %c0_i32, %c0_i32_0 : i32, i32
  }
  func.func @transform_3(%arg0: i32) -> (i32, i32) {
    %c0_i32 = arith.constant 0 : i32
    %c0_i32_0 = arith.constant 0 : i32
    %c0_i32_1 = arith.constant 0 : i32
    return %c0_i32, %c0_i32_0 : i32, i32
  }
  func.func @transform_4(%arg0: i32) -> (i32, i32) {
    %c0_i32 = arith.constant 0 : i32
    %c0_i32_0 = arith.constant 0 : i32
    %c0_i32_1 = arith.constant 0 : i32
    return %c0_i32, %c0_i32_0 : i32, i32
  }
  func.func @transform_5(%arg0: i32) -> (i32, i32) {
    %c0_i32 = arith.constant 0 : i32
    %c0_i32_0 = arith.constant 0 : i32
    %c0_i32_1 = arith.constant 0 : i32
    return %c0_i32, %c0_i32_0 : i32, i32
  }
  func.func @transform_6(%arg0: i32) -> (i32, i32) {
    %c0_i32 = arith.constant 0 : i32
    %c0_i32_0 = arith.constant 0 : i32
    %c0_i32_1 = arith.constant 0 : i32
    return %c0_i32, %c0_i32_0 : i32, i32
  }
}

</mosaic_0001>

<llo_original>
// kernel: _lambda_.13
$region0: #{_lambda_.13}
  #allocation0 [shape = 'u32[]', space=smem, size = 0x4, offset = 0x4, fixed_abs, tag = 'smem constant byte address 0x4 - core index']
  #allocation1 [shape = 'u32[72,128]{1,0:T(1,128)}', space=vmem, size = 0x9000, scoped, tag = 'internal scratch']
  #allocation2 [shape = 'f32[16,96]{1,0:T(8,128)}', space=vmem, size = 0x2000, scoped, tag = 'scratch operand']
  %s0 = inlined_call_operand.vmem [shape: bf16[16,32], index: 0, kind: input, shape index: {}]
  %s1 = inlined_call_operand.vmem [shape: bf16[32,96], index: 1, kind: input, shape index: {}]
  %s2 = inlined_call_operand.vmem [shape: f32[1,96], index: 2, kind: input, shape index: {}]
  %s3 = inlined_call_operand.vmem [shape: bf16[16,96], index: 3, kind: output, shape index: {}]
  %s4 = sld [smem:[#allocation0]]
  $region30: #{_lambda_.13} parent=0
    _
  %s6 = ssub.s32 1, %s4
  %s7 = scalar_select 0, %s6, %s4
  // Predicated region
  $region2: #{_lambda_.13} parent=0 // pred_check
    _
  $region3: #{_lambda_.13} parent=0 // pred_check_branch
    %9 = sbr.rel (0) target = $region5
  $region4: #{_lambda_.13} parent=0 // pred_region
    _
  $region5: #{_lambda_.13} parent=0 // pred_fallthru
    _
  // Predicated region
  $region6: #{_lambda_.13} parent=0 // pred_check
    _
  $region7: #{_lambda_.13} parent=0 // pred_check_branch
    %11 = sbr.rel (0) target = $region9
  $region8: #{_lambda_.13} parent=0 // pred_region
    _
  $region9: #{_lambda_.13} parent=0 // pred_fallthru
    _
  // Predicated region
  $region10: #{_lambda_.13} parent=0 // pred_check
    _
  $region11: #{_lambda_.13} parent=0 // pred_check_branch
    %13 = sbr.rel (0) target = $region13
  $region12: #{_lambda_.13} parent=0 // pred_region
    _
  $region13: #{_lambda_.13} parent=0 // pred_fallthru
    _
  %p15 = scmp.eq.s32.totalorder 0, 0
  // Predicated region
  $region14: #{_lambda_.13} parent=0 // pred_check
    %p16 = pneg %p15
  $region15: #{_lambda_.13} parent=0 // pred_check_branch
    %18 = sbr.rel (%p16) target = $region17
  $region16: #{_lambda_.13} parent=0 // pred_region
    %vm19 = vcmask 785408
    %20 = vst.msk [vmem:[#allocation2] sm:$0xff] %vm19, 0.0
    %21 = vst.msk [vmem:[#allocation2 + $0x8] sm:$0xff] %vm19, 0.0
  $region17: #{_lambda_.13} parent=0 // pred_fallthru
    _
  %v22 = vld [vmem:[#allocation2] sm:$0xff]
  %v23 = vld [vmem:[#allocation2 + $0x8] sm:$0xff]
  %v24 = vld [vmem:[%s0] sm:$0xf]
  %v25 = vld [vmem:[%s0 + $0x4] sm:$0xf]
  %v26 = vld [vmem:[%s1] sm:$0xf]
  %v27 = vld [vmem:[%s1 + $0x4] sm:$0xf]
  %v28 = vld [vmem:[%s1 + $0x8] sm:$0xf]
  %v29 = vld [vmem:[%s1 + $0xc] sm:$0xf]
  %v32 = vunpack.c.l.b16 %v24
  %v33 = vunpack.c.l.b16 %v25
  %v34 = vpack.c.b16 %v33, %v32
  %v39 = vunpack.c.l.b16 %v26
  %v40 = vunpack.c.l.b16 %v27
  %v41 = vunpack.c.l.b16 %v28
  %v42 = vunpack.c.l.b16 %v29
  %v43 = vpack.c.b16 %v40, %v39
  %v44 = vpack.c.b16 %v42, %v41
  %vm47 = vcmask 261120
  %v49 = vsel %vm47, %v34, 0
  %51 = vmatpush.bf16.msra.mxu0 0
  %52 = vmatpush.bf16.msra.mxu0 0
  %53 = vmatpush.bf16.msra.mxu0 0
  %54 = vmatpush.bf16.msra.mxu0 0
  %55 = vmatpush.bf16.msra.mxu0 0
  %56 = vmatpush.bf16.msra.mxu0 0
  %57 = vmatpush.bf16.msra.mxu0 %v44
  %58 = vmatpush.bf16.msra.mxu0 %v43
  %59 = vmatmul.bf16.gmra.mxu0 %v49
  %v60 = vpop.f32.mrf.mxu0
  %v61 = vadd.f32 0.0, %v60
  %v62 = vpop.f32.mrf.mxu0
  %v63 = vadd.f32 0.0, %v62
  %64 = vdwg.mxu0
  %v65 = vadd.f32 %v22, %v61
  %v66 = vadd.f32 %v23, %v63
  %vm67 = vcmask 785408
  %68 = vst.msk [vmem:[#allocation2] sm:$0xff] %vm67, %v65
  %69 = vst.msk [vmem:[#allocation2 + $0x8] sm:$0xff] %vm67, %v66
  // Predicated region
  $region18: #{_lambda_.13} parent=0 // pred_check
    %p70 = pneg %p15
  $region19: #{_lambda_.13} parent=0 // pred_check_branch
    %72 = sbr.rel (%p70) target = $region21
  $region20: #{_lambda_.13} parent=0 // pred_region
    %v73 = vld [vmem:[#allocation2] sm:$0xff]
    %v74 = vld [vmem:[#allocation2 + $0x8] sm:$0xff]
    %v75 = vld [vmem:[%s2] sm:$0x1]
    %v77 = vperm.slane %v75, 0
    %v79 = vadd.f32 %v73, %v77
    %v80 = vadd.f32 %v74, %v77
    %v81 = vpack.c.bf16 %v79, %v79
    %v82 = vpack.c.bf16 %v80, %v80
    %vm83 = vcmask 781312
    %84 = vst.msk [vmem:[%s3] sm:$0xf] %vm83, %v81
    %85 = vst.msk [vmem:[%s3 + $0x4] sm:$0xf] %vm83, %v82
  $region21: #{_lambda_.13} parent=0 // pred_fallthru
    _
  // Predicated region
  $region22: #{_lambda_.13} parent=0 // pred_check
    _
  $region23: #{_lambda_.13} parent=0 // pred_check_branch
    %87 = sbr.rel (0) target = $region25
  $region24: #{_lambda_.13} parent=0 // pred_region
    _
  $region25: #{_lambda_.13} parent=0 // pred_fallthru
    _
  // Predicated region
  $region26: #{_lambda_.13} parent=0 // pred_check
    _
  $region27: #{_lambda_.13} parent=0 // pred_check_branch
    %89 = sbr.rel (0) target = $region29
  $region28: #{_lambda_.13} parent=0 // pred_region
    _
  $region29: #{_lambda_.13} parent=0 // pred_fallthru
    _

// kernel: _lambda_.12
$region0: #{_lambda_.12}
  #allocation0 [shape = 'u32[]', space=smem, size = 0x4, offset = 0x4, fixed_abs, tag = 'smem constant byte address 0x4 - core index']
  #allocation1 [shape = 'u32[72,128]{1,0:T(1,128)}', space=vmem, size = 0x9000, scoped, tag = 'internal scratch']
  %s0 = inlined_call_operand.vmem [shape: f32[16,32], index: 0, kind: input, shape index: {}]
  %s1 = inlined_call_operand.vmem [shape: f32[1,32], index: 1, kind: input, shape index: {}]
  %s2 = inlined_call_operand.vmem [shape: f32[1,32], index: 2, kind: input, shape index: {}]
  %s3 = inlined_call_operand.vmem [shape: bf16[16,32], index: 3, kind: output, shape index: {}]
  %s4 = sld [smem:[#allocation0]]
  $region22: #{_lambda_.12} parent=0
    _
  %s6 = ssub.s32 1, %s4
  %s7 = scalar_select 0, %s6, %s4
  // Predicated region
  $region2: #{_lambda_.12} parent=0 // pred_check
    _
  $region3: #{_lambda_.12} parent=0 // pred_check_branch
    %9 = sbr.rel (0) target = $region5
  $region4: #{_lambda_.12} parent=0 // pred_region
    _
  $region5: #{_lambda_.12} parent=0 // pred_fallthru
    _
  // Predicated region
  $region6: #{_lambda_.12} parent=0 // pred_check
    _
  $region7: #{_lambda_.12} parent=0 // pred_check_branch
    %11 = sbr.rel (0) target = $region9
  $region8: #{_lambda_.12} parent=0 // pred_region
    _
  $region9: #{_lambda_.12} parent=0 // pred_fallthru
    _
  // Predicated region
  $region10: #{_lambda_.12} parent=0 // pred_check
    _
  $region11: #{_lambda_.12} parent=0 // pred_check_branch
    %13 = sbr.rel (0) target = $region13
  $region12: #{_lambda_.12} parent=0 // pred_region
    _
  $region13: #{_lambda_.12} parent=0 // pred_fallthru
    _
  %v14 = vld [vmem:[%s0] sm:$0xff]
  %v15 = vld [vmem:[%s0 + $0x8] sm:$0xff]
  %vm16 = vcmask 261120
  %v17 = vsel %vm16, %v14, 0.0
  %18 = vadd.xlane.f32.xlu0 %v17
  %v19 = vpop.xlane.xlu0 %18
  %v20 = vsel %vm16, %v15, 0.0
  %21 = vadd.xlane.f32.xlu0 %v20
  %v22 = vpop.xlane.xlu0 %21
  %v23 = vrcp.pop 32.0
  %v24 = vmul.f32 32.0, %v23
  %v25 = vsub.f32 1.0, %v24
  %v26 = vmul.f32 %v23, %v25
  %v27 = vadd.f32 %v23, %v26
  %vm28 = vweird.f32 %v23
  %v29 = vsel %vm28, %v23, %v27
  %v30 = vmul.f32 %v19, %v29
  %v31 = vmul.f32 %v22, %v29
  %v32 = vsub.f32 %v14, %v30
  %v33 = vsub.f32 %v15, %v31
  %v34 = vmul.f32 %v32, %v32
  %v35 = vmul.f32 %v33, %v33
  %v36 = vsel %vm16, %v34, 0.0
  %37 = vadd.xlane.f32.xlu0 %v36
  %v38 = vpop.xlane.xlu0 %37
  %v39 = vsel %vm16, %v35, 0.0
  %40 = vadd.xlane.f32.xlu0 %v39
  %v41 = vpop.xlane.xlu0 %40
  %v42 = vmul.f32 %v38, %v29
  %v43 = vmul.f32 %v41, %v29
  %v44 = vadd.f32 %v42, 1e-12
  %v45 = vadd.f32 %v43, 1e-12
  %v46 = vrsqrt.pop %v44
  %v47 = vmul.f32 %v46, %v44
  %v48 = vmul.f32 %v47, %v46
  %v49 = vmul.f32 0.5, %v48
  %v50 = vsub.f32 1.5, %v49
  %v51 = vmul.f32 %v46, %v50
  %vm52 = vweird.f32 %v44
  %vm53 = vweird.f32 %v46
  %vm54 = vmor %vm52, %vm53
  %v55 = vsel %vm54, %v46, %v51
  %v56 = vrsqrt.pop %v45
  %v57 = vmul.f32 %v56, %v45
  %v58 = vmul.f32 %v57, %v56
  %v59 = vmul.f32 0.5, %v58
  %v60 = vsub.f32 1.5, %v59
  %v61 = vmul.f32 %v56, %v60
  %vm62 = vweird.f32 %v45
  %vm63 = vweird.f32 %v56
  %vm64 = vmor %vm62, %vm63
  %v65 = vsel %vm64, %v56, %v61
  %v66 = vmul.f32 %v32, %v55
  %v67 = vmul.f32 %v33, %v65
  %v68 = vld [vmem:[%s1] sm:$0x1]
  %v70 = vperm.slane %v68, 0
  %v72 = vmul.f32 %v66, %v70
  %v73 = vmul.f32 %v67, %v70
  %v74 = vld [vmem:[%s2] sm:$0x1]
  %v76 = vperm.slane %v74, 0
  %v78 = vadd.f32 %v72, %v76
  %v79 = vadd.f32 %v73, %v76
  %v80 = vpack.c.bf16 %v78, %v78
  %v81 = vpack.c.bf16 %v79, %v79
  %vm82 = vcmask 257024
  %83 = vst.msk [vmem:[%s3] sm:$0xf] %vm82, %v80
  %84 = vst.msk [vmem:[%s3 + $0x4] sm:$0xf] %vm82, %v81
  // Predicated region
  $region14: #{_lambda_.12} parent=0 // pred_check
    _
  $region15: #{_lambda_.12} parent=0 // pred_check_branch
    %86 = sbr.rel (0) target = $region17
  $region16: #{_lambda_.12} parent=0 // pred_region
    _
  $region17: #{_lambda_.12} parent=0 // pred_fallthru
    _
  // Predicated region
  $region18: #{_lambda_.12} parent=0 // pred_check
    _
  $region19: #{_lambda_.12} parent=0 // pred_check_branch
    %88 = sbr.rel (0) target = $region21
  $region20: #{_lambda_.12} parent=0 // pred_region
    _
  $region21: #{_lambda_.12} parent=0 // pred_fallthru
    _

// kernel: _lambda_.15
$region0: #{_lambda_.15}
  #allocation0 [shape = 'u32[]', space=smem, size = 0x4, offset = 0x4, fixed_abs, tag = 'smem constant byte address 0x4 - core index']
  #allocation1 [shape = 'u32[72,128]{1,0:T(1,128)}', space=vmem, size = 0x9000, scoped, tag = 'internal scratch']
  #allocation2 [shape = 'f32[16,32]{1,0:T(8,128)}', space=vmem, size = 0x2000, scoped, tag = 'scratch operand']
  %s0 = inlined_call_operand.vmem [shape: bf16[16,32], index: 0, kind: input, shape index: {}]
  %s1 = inlined_call_operand.vmem [shape: bf16[32,32], index: 1, kind: input, shape index: {}]
  %s2 = inlined_call_operand.vmem [shape: f32[1,32], index: 2, kind: input, shape index: {}]
  %s3 = inlined_call_operand.vmem [shape: bf16[16,32], index: 3, kind: input, shape index: {}]
  %s4 = inlined_call_operand.vmem [shape: f32[1,32], index: 4, kind: input, shape index: {}]
  %s5 = inlined_call_operand.vmem [shape: f32[1,32], index: 5, kind: input, shape index: {}]
  %s6 = inlined_call_operand.vmem [shape: bf16[16,32], index: 6, kind: output, shape index: {}]
  %s7 = sld [smem:[#allocation0]]
  $region42: #{_lambda_.15} parent=0
    _
  %s9 = ssub.s32 1, %s7
  %s10 = scalar_select 0, %s9, %s7
  // Predicated region
  $region2: #{_lambda_.15} parent=0 // pred_check
    _
  $region3: #{_lambda_.15} parent=0 // pred_check_branch
    %12 = sbr.rel (0) target = $region5
  $region4: #{_lambda_.15} parent=0 // pred_region
    _
  $region5: #{_lambda_.15} parent=0 // pred_fallthru
    _
  // Predicated region
  $region6: #{_lambda_.15} parent=0 // pred_check
    _
  $region7: #{_lambda_.15} parent=0 // pred_check_branch
    %14 = sbr.rel (0) target = $region9
  $region8: #{_lambda_.15} parent=0 // pred_region
    _
  $region9: #{_lambda_.15} parent=0 // pred_fallthru
    _
  // Predicated region
  $region10: #{_lambda_.15} parent=0 // pred_check
    _
  $region11: #{_lambda_.15} parent=0 // pred_check_branch
    %16 = sbr.rel (0) target = $region13
  $region12: #{_lambda_.15} parent=0 // pred_region
    _
  $region13: #{_lambda_.15} parent=0 // pred_fallthru
    _
  // Predicated region
  $region14: #{_lambda_.15} parent=0 // pred_check
    _
  $region15: #{_lambda_.15} parent=0 // pred_check_branch
    %18 = sbr.rel (0) target = $region17
  $region16: #{_lambda_.15} parent=0 // pred_region
    _
  $region17: #{_lambda_.15} parent=0 // pred_fallthru
    _
  // Predicated region
  $region18: #{_lambda_.15} parent=0 // pred_check
    _
  $region19: #{_lambda_.15} parent=0 // pred_check_branch
    %20 = sbr.rel (0) target = $region21
  $region20: #{_lambda_.15} parent=0 // pred_region
    _
  $region21: #{_lambda_.15} parent=0 // pred_fallthru
    _
  // Predicated region
  $region22: #{_lambda_.15} parent=0 // pred_check
    _
  $region23: #{_lambda_.15} parent=0 // pred_check_branch
    %22 = sbr.rel (0) target = $region25
  $region24: #{_lambda_.15} parent=0 // pred_region
    _
  $region25: #{_lambda_.15} parent=0 // pred_fallthru
    _
  %p24 = scmp.eq.s32.totalorder 0, 0
  // Predicated region
  $region26: #{_lambda_.15} parent=0 // pred_check
    %p25 = pneg %p24
  $region27: #{_lambda_.15} parent=0 // pred_check_branch
    %27 = sbr.rel (%p25) target = $region29
  $region28: #{_lambda_.15} parent=0 // pred_region
    %vm28 = vcmask 261120
    %29 = vst.msk [vmem:[#allocation2] sm:$0xff] %vm28, 0.0
    %30 = vst.msk [vmem:[#allocation2 + $0x8] sm:$0xff] %vm28, 0.0
  $region29: #{_lambda_.15} parent=0 // pred_fallthru
    _
  %v31 = vld [vmem:[#allocation2] sm:$0xff]
  %v32 = vld [vmem:[#allocation2 + $0x8] sm:$0xff]
  %v33 = vld [vmem:[%s0] sm:$0xf]
  %v34 = vld [vmem:[%s0 + $0x4] sm:$0xf]
  %v35 = vld [vmem:[%s1] sm:$0xf]
  %v36 = vld [vmem:[%s1 + $0x4] sm:$0xf]
  %v37 = vld [vmem:[%s1 + $0x8] sm:$0xf]
  %v38 = vld [vmem:[%s1 + $0xc] sm:$0xf]
  %v41 = vunpack.c.l.b16 %v33
  %v42 = vunpack.c.l.b16 %v34
  %v43 = vpack.c.b16 %v42, %v41
  %v48 = vunpack.c.l.b16 %v35
  %v49 = vunpack.c.l.b16 %v36
  %v50 = vunpack.c.l.b16 %v37
  %v51 = vunpack.c.l.b16 %v38
  %v52 = vpack.c.b16 %v49, %v48
  %v53 = vpack.c.b16 %v51, %v50
  %vm56 = vcmask 261120
  %v58 = vsel %vm56, %v43, 0
  %60 = vmatpush.bf16.msra.mxu0 0
  %61 = vmatpush.bf16.msra.mxu0 0
  %62 = vmatpush.bf16.msra.mxu0 0
  %63 = vmatpush.bf16.msra.mxu0 0
  %64 = vmatpush.bf16.msra.mxu0 0
  %65 = vmatpush.bf16.msra.mxu0 0
  %66 = vmatpush.bf16.msra.mxu0 %v53
  %67 = vmatpush.bf16.msra.mxu0 %v52
  %68 = vmatmul.bf16.gmra.mxu0 %v58
  %v69 = vpop.f32.mrf.mxu0
  %v70 = vadd.f32 0.0, %v69
  %v71 = vpop.f32.mrf.mxu0
  %v72 = vadd.f32 0.0, %v71
  %73 = vdwg.mxu0
  %v74 = vadd.f32 %v31, %v70
  %v75 = vadd.f32 %v32, %v72
  %76 = vst.msk [vmem:[#allocation2] sm:$0xff] %vm56, %v74
  %77 = vst.msk [vmem:[#allocation2 + $0x8] sm:$0xff] %vm56, %v75
  // Predicated region
  $region30: #{_lambda_.15} parent=0 // pred_check
    %p78 = pneg %p24
  $region31: #{_lambda_.15} parent=0 // pred_check_branch
    %80 = sbr.rel (%p78) target = $region33
  $region32: #{_lambda_.15} parent=0 // pred_region
    %v81 = vld [vmem:[#allocation2] sm:$0xff]
    %v82 = vld [vmem:[#allocation2 + $0x8] sm:$0xff]
    %v83 = vld [vmem:[%s2] sm:$0x1]
    %v85 = vperm.slane %v83, 0
    %v87 = vadd.f32 %v81, %v85
    %v88 = vadd.f32 %v82, %v85
    %v89 = vld [vmem:[%s3] sm:$0xf]
    %v90 = vld [vmem:[%s3 + $0x4] sm:$0xf]
    %v91 = vunpack.c.l.bf16 %v89
    %v92 = vunpack.c.l.bf16 %v90
    %v93 = vadd.f32 %v87, %v91
    %v94 = vadd.f32 %v88, %v92
    %v95 = vsel %vm56, %v93, 0.0
    %96 = vadd.xlane.f32.xlu0 %v95
    %v97 = vpop.xlane.xlu0 %96
    %v98 = vsel %vm56, %v94, 0.0
    %99 = vadd.xlane.f32.xlu0 %v98
    %v100 = vpop.xlane.xlu0 %99
    %v101 = vrcp.pop 32.0
    %v102 = vmul.f32 32.0, %v101
    %v103 = vsub.f32 1.0, %v102
    %v104 = vmul.f32 %v101, %v103
    %v105 = vadd.f32 %v101, %v104
    %vm106 = vweird.f32 %v101
    %v107 = vsel %vm106, %v101, %v105
    %v108 = vmul.f32 %v97, %v107
    %v109 = vmul.f32 %v100, %v107
    %v110 = vsub.f32 %v93, %v108
    %v111 = vsub.f32 %v94, %v109
    %v112 = vmul.f32 %v110, %v110
    %v113 = vmul.f32 %v111, %v111
    %v114 = vsel %vm56, %v112, 0.0
    %115 = vadd.xlane.f32.xlu0 %v114
    %v116 = vpop.xlane.xlu0 %115
    %v117 = vsel %vm56, %v113, 0.0
    %118 = vadd.xlane.f32.xlu0 %v117
    %v119 = vpop.xlane.xlu0 %118
    %v120 = vmul.f32 %v116, %v107
    %v121 = vmul.f32 %v119, %v107
    %v122 = vadd.f32 %v120, 1e-12
    %v123 = vadd.f32 %v121, 1e-12
    %v124 = vrsqrt.pop %v122
    %v125 = vmul.f32 %v124, %v122
    %v126 = vmul.f32 %v125, %v124
    %v127 = vmul.f32 0.5, %v126
    %v128 = vsub.f32 1.5, %v127
    %v129 = vmul.f32 %v124, %v128
    %vm130 = vweird.f32 %v122
    %vm131 = vweird.f32 %v124
    %vm132 = vmor %vm130, %vm131
    %v133 = vsel %vm132, %v124, %v129
    %v134 = vrsqrt.pop %v123
    %v135 = vmul.f32 %v134, %v123
    %v136 = vmul.f32 %v135, %v134
    %v137 = vmul.f32 0.5, %v136
    %v138 = vsub.f32 1.5, %v137
    %v139 = vmul.f32 %v134, %v138
    %vm140 = vweird.f32 %v123
    %vm141 = vweird.f32 %v134
    %vm142 = vmor %vm140, %vm141
    %v143 = vsel %vm142, %v134, %v139
    %v144 = vmul.f32 %v110, %v133
    %v145 = vmul.f32 %v111, %v143
    %v146 = vld [vmem:[%s4] sm:$0x1]
    %v148 = vperm.slane %v146, 0
    %v150 = vmul.f32 %v144, %v148
    %v151 = vmul.f32 %v145, %v148
    %v152 = vld [vmem:[%s5] sm:$0x1]
    %v154 = vperm.slane %v152, 0
    %v156 = vadd.f32 %v150, %v154
    %v157 = vadd.f32 %v151, %v154
    %v158 = vpack.c.bf16 %v156, %v156
    %v159 = vpack.c.bf16 %v157, %v157
    %vm160 = vcmask 257024
    %161 = vst.msk [vmem:[%s6] sm:$0xf] %vm160, %v158
    %162 = vst.msk [vmem:[%s6 + $0x4] sm:$0xf] %vm160, %v159
  $region33: #{_lambda_.15} parent=0 // pred_fallthru
    _
  // Predicated region
  $region34: #{_lambda_.15} parent=0 // pred_check
    _
  $region35: #{_lambda_.15} parent=0 // pred_check_branch
    %164 = sbr.rel (0) target = $region37
  $region36: #{_lambda_.15} parent=0 // pred_region
    _
  $region37: #{_lambda_.15} parent=0 // pred_fallthru
    _
  // Predicated region
  $region38: #{_lambda_.15} parent=0 // pred_check
    _
  $region39: #{_lambda_.15} parent=0 // pred_check_branch
    %166 = sbr.rel (0) target = $region41
  $region40: #{_lambda_.15} parent=0 // pred_region
    _
  $region41: #{_lambda_.15} parent=0 // pred_fallthru
    _

// kernel: _lambda_.14
$region0: #{_lambda_.14}
  #allocation0 [shape = 'u32[]', space=smem, size = 0x4, offset = 0x4, fixed_abs, tag = 'smem constant byte address 0x4 - core index']
  #allocation1 [shape = 'u32[72,128]{1,0:T(1,128)}', space=vmem, size = 0x9000, scoped, tag = 'internal scratch']
  %s0 = inlined_call_operand.vmem [shape: bf16[2,8,96], index: 0, kind: input, shape index: {}]
  %s1 = inlined_call_operand.vmem [shape: f32[2,1,8], index: 1, kind: input, shape index: {}]
  %s2 = inlined_call_operand.vmem [shape: bf16[2,8,32], index: 2, kind: output, shape index: {}]
  %s3 = sld [smem:[#allocation0]]
  $region41: #{_lambda_.14} parent=0
    _
  %s5 = ssub.s32 1, %s3
  %s6 = scalar_select 0, %s5, %s3
  loop: start=0, step=1, limit=4
  $region2: #{_lambda_.14} parent=0 // loop_pre_header
    _
  $region3: #{_lambda_.14} parent=0 // loop_header
    %s8 = sphi 0, %s12
    %p9 = scmp.ge.s32.totalorder %s8, 4
    %s18 = sphi 0, %s20
    %s21 = sphi 0, %s18
    %s22 = sphi 0, %s21
    %s38 = sphi 0, %s22
    %s44 = sphi 0, %s46
    %s47 = sphi 0, %s44
    %s48 = sphi 0, %s47
    %s64 = sphi 0, %s48
    %s70 = sphi 0, %s72
    %s73 = sphi 0, %s70
    %s74 = sphi 0, %s73
    %s90 = sphi 0, %s74
  $region4: #{_lambda_.14} parent=0 // loop_header_branch
    %11 = sbr.rel (%p9) target = $region8
  $region5: #{_lambda_.14} parent=0 // loop_body
    %s13 = ssub.s32 %s8, 1
    %s14 = ssub.s32 %s8, 2
    %s15 = sadd.s32 %s8, 1
    %s16 = ssub.s32 %s8, %s15
    %p17 = scmp.eq.s32.totalorder %s16, 0
    %s19 = sadd.s32 %s18, 1
    %s20 = scalar_select %p17, %s18, %s19
    %p23 = pneg %p17
    %p24 = scmp.eq.s32.totalorder %s8, 1
    %p25 = por %p23, %p24
    %p26 = scmp.ne.s32.totalorder %s18, %s21
    %p27 = scmp.eq.s32.totalorder %s8, 0
    %p28 = por %p26, %p27
    %p29 = scmp.ne.s32.totalorder %s18, %s21
    %p30 = scmp.eq.s32.totalorder %s13, 1
    %p31 = por %p29, %p30
    %p32 = scmp.ne.s32.totalorder %s21, %s22
    %p33 = scmp.eq.s32.totalorder %s13, 0
    %p34 = por %p32, %p33
    %p35 = scmp.ne.s32.totalorder %s21, %s22
    %p36 = scmp.eq.s32.totalorder %s14, 1
    %p37 = por %p35, %p36
    %p39 = scmp.ne.s32.totalorder %s22, %s38
    %p40 = scmp.eq.s32.totalorder %s14, 0
    %p41 = por %p39, %p40
    %s42 = ssub.s32 %s8, %s15
    %p43 = scmp.eq.s32.totalorder %s42, 0
    %s45 = sadd.s32 %s44, 1
    %s46 = scalar_select %p43, %s44, %s45
    %p49 = pneg %p43
    %p50 = scmp.eq.s32.totalorder %s8, 1
    %p51 = por %p49, %p50
    %p52 = scmp.ne.s32.totalorder %s44, %s47
    %p53 = scmp.eq.s32.totalorder %s8, 0
    %p54 = por %p52, %p53
    %p55 = scmp.ne.s32.totalorder %s44, %s47
    %p56 = scmp.eq.s32.totalorder %s13, 1
    %p57 = por %p55, %p56
    %p58 = scmp.ne.s32.totalorder %s47, %s48
    %p59 = scmp.eq.s32.totalorder %s13, 0
    %p60 = por %p58, %p59
    %p61 = scmp.ne.s32.totalorder %s47, %s48
    %p62 = scmp.eq.s32.totalorder %s14, 1
    %p63 = por %p61, %p62
    %p65 = scmp.ne.s32.totalorder %s48, %s64
    %p66 = scmp.eq.s32.totalorder %s14, 0
    %p67 = por %p65, %p66
    %s68 = ssub.s32 %s8, %s15
    %p69 = scmp.eq.s32.totalorder %s68, 0
    %s71 = sadd.s32 %s70, 1
    %s72 = scalar_select %p69, %s70, %s71
    %p75 = pneg %p69
    %p76 = scmp.eq.s32.totalorder %s8, 1
    %p77 = por %p75, %p76
    %p78 = scmp.ne.s32.totalorder %s70, %s73
    %p79 = scmp.eq.s32.totalorder %s8, 0
    %p80 = por %p78, %p79
    %p81 = scmp.ne.s32.totalorder %s70, %s73
    %p82 = scmp.eq.s32.totalorder %s13, 1
    %p83 = por %p81, %p82
    %p84 = scmp.ne.s32.totalorder %s73, %s74
    %p85 = scmp.eq.s32.totalorder %s13, 0
    %p86 = por %p84, %p85
    %p87 = scmp.ne.s32.totalorder %s73, %s74
    %p88 = scmp.eq.s32.totalorder %s14, 1
    %p89 = por %p87, %p88
    %p91 = scmp.ne.s32.totalorder %s74, %s90
    %p92 = scmp.eq.s32.totalorder %s14, 0
    %p93 = por %p91, %p92
    %p94 = scmp.le.s32.totalorder 1, %s8
    %p95 = scmp.lt.s32.totalorder %s8, 3
    %p96 = pnand %p94, %p95
    %p97 = pneg %p96
    // Predicated region
    $region9: #{_lambda_.14} parent=5 // pred_check
      _
    $region10: #{_lambda_.14} parent=5 // pred_check_branch
      %99 = sbr.rel (%p96) target = $region12
    $region11: #{_lambda_.14} parent=5 // pred_region
      %s100 = ssub.s32 %s8, 1
    $region12: #{_lambda_.14} parent=5 // pred_fallthru
      _
    %p101 = scmp.lt.s32.totalorder %s8, 2
    // Predicated region
    $region13: #{_lambda_.14} parent=5 // pred_check
      %p102 = pneg %p101
    $region14: #{_lambda_.14} parent=5 // pred_check_branch
      %104 = sbr.rel (%p102) target = $region16
    $region15: #{_lambda_.14} parent=5 // pred_region
      // Predicated region
      $region17: #{_lambda_.14} parent=15 // pred_check
        %p105 = pneg %p28
      $region18: #{_lambda_.14} parent=15 // pred_check_branch
        %107 = sbr.rel (%p105) target = $region20
      $region19: #{_lambda_.14} parent=15 // pred_region
        %p108 = scmp.lt.s32.totalorder %s8, 1
        %s109 = scalar_select %p108, %s8, 1
        %s110 = smul.addr %s109, 4
        %s111 = scalar_lea.vmem %s0, %s110
      $region20: #{_lambda_.14} parent=15 // pred_fallthru
        _
      // Predicated region
      $region21: #{_lambda_.14} parent=15 // pred_check
        %p112 = pneg %p54
      $region22: #{_lambda_.14} parent=15 // pred_check_branch
        %114 = sbr.rel (%p112) target = $region24
      $region23: #{_lambda_.14} parent=15 // pred_region
        %p115 = scmp.lt.s32.totalorder %s8, 1
        %s116 = scalar_select %p115, %s8, 1
        %s117 = scalar_lea.vmem %s1, %s116
      $region24: #{_lambda_.14} parent=15 // pred_fallthru
        _
    $region16: #{_lambda_.14} parent=5 // pred_fallthru
      _
    %p118 = scmp.le.s32.totalorder 1, %s8
    %p119 = scmp.lt.s32.totalorder %s8, 3
    %p120 = pnand %p118, %p119
    %p121 = pneg %p120
    // Predicated region
    $region25: #{_lambda_.14} parent=5 // pred_check
      _
    $region26: #{_lambda_.14} parent=5 // pred_check_branch
      %123 = sbr.rel (%p120) target = $region28
    $region27: #{_lambda_.14} parent=5 // pred_region
      %s124 = ssub.s32 %s8, 1
      %p125 = scmp.lt.s32.totalorder %s13, 1
      %s126 = scalar_select %p125, %s13, 1
      %s127 = smul.addr %s126, 4
      %s128 = scalar_lea.vmem %s0, %s127
      %p129 = pneg %p34
      %p130 = pneg %p31
      %p131 = scmp.lt.s32.totalorder %s13, 1
      %s132 = scalar_select %p131, %s13, 1
      %s133 = scalar_lea.vmem %s1, %s132
      %p134 = pneg %p60
      %p135 = pneg %p57
      %p136 = pneg %p86
      %p137 = pneg %p83
      %p138 = scmp.lt.s32.totalorder %s13, 1
      %s139 = scalar_select %p138, %s13, 1
      %s140 = smul.addr %s139, 4
      %s141 = scalar_lea.vmem %s2, %s140
      %p142 = scmp.lt.s32.totalorder %s13, 1
      %s143 = scalar_select %p142, %s13, 1
      %s144 = smul.addr %s143, 4
      %s145 = scalar_lea.vmem %s0, %s144
      %p146 = scmp.lt.s32.totalorder %s13, 1
      %s147 = scalar_select %p146, %s13, 1
      %s148 = scalar_lea.vmem %s1, %s147
      %p149 = scmp.lt.s32.totalorder %s13, 1
      %s150 = scalar_select %p149, %s13, 1
      %s151 = smul.addr %s150, 4
      %s152 = scalar_lea.vmem %s2, %s151
      %v154 = vld [vmem:[%s145] sm:$0xf]
      %v155 = vld [vmem:[%s148] sm:$0x1]
      %v156 = vunpack.c.l.bf16 %v154
      %158 = vrot.lane.b32.xlu0 %v156, 96
      %v159 = vpop.permute.xlu0 %158
      %vm160 = vcmask 64512
      %v161 = vsel %vm160, %v156, 0
      %v163 = vsel %vm160, %v159, 0
      %165 = vmatpush.xpose.msra.mxu0 0.0
      %166 = vmatpush.xpose.msra.mxu0 0.0
      %167 = vmatpush.xpose.msra.mxu0 0.0
      %168 = vmatpush.xpose.msra.mxu0 0.0
      %169 = vmatpush.xpose.msra.mxu0 0.0
      %170 = vmatpush.xpose.msra.mxu0 0.0
      %171 = vmatpush.xpose.msra.mxu0 0.0
      %172 = vmatpush.xpose.msra.mxu0 0.0
      %173 = vmatpush.xpose.msra.mxu0 0.0
      %174 = vmatpush.xpose.msra.mxu0 0.0
      %175 = vmatpush.xpose.msra.mxu0 0.0
      %176 = vmatpush.xpose.msra.mxu0 0.0
      %177 = vmatpush.xpose.msra.mxu0 0.0
      %178 = vmatpush.xpose.msra.mxu0 0.0
      %179 = vmatpush.xpose.msra.mxu0 0.0
      %180 = vmatpush.xpose.msra.mxu0 %v163
      %181 = vmatmul.f32.gmra.mxu0 %v161
      %v182 = vpop.f32.mrf.mxu0
      %v183 = vadd.f32 0.0, %v182
      %184 = vdwg.mxu0
      %v185 = vmul.f32 %v183, 0.35355338
      %v187 = vperm.slane %v155, 0
      %v189 = vadd.f32 %v185, %v187
      %v190 = vsel %vm160, %v189, -inf
      %191 = vmax.xlane.f32.xlu0 %v190
      %v192 = vpop.xlane.xlu0 %191
      %v193 = vsub.f32 %v189, %v192
      %v194 = vmul.f32 %v193, 1.442695
      %v195 = vpow.pop %v194
      %v196 = vsel %vm160, %v195, 0.0
      %197 = vadd.xlane.f32.xlu0 %v196
      %v198 = vpop.xlane.xlu0 %197
      %v199 = vrcp.pop %v198
      %v200 = vmul.f32 %v195, %v199
      %v201 = vpack.c.bf16 %v200, %v200
      %v203 = vunpack.c.l.b16 %v154
      %v204 = vpack.c.b16 %v203, %v203
      %205 = vrot.lane.b32.xlu0 %v204, 64
      %v206 = vpop.permute.xlu0 %205
      %v208 = vsel %vm160, %v201, 0
      %vm210 = vcmask 1043456
      %v212 = vsel %vm210, %v206, 0
      %214 = vmatpush.bf16.msra.mxu0 0
      %215 = vmatpush.bf16.msra.mxu0 0
      %216 = vmatpush.bf16.msra.mxu0 0
      %217 = vmatpush.bf16.msra.mxu0 0
      %218 = vmatpush.bf16.msra.mxu0 0
      %219 = vmatpush.bf16.msra.mxu0 0
      %220 = vmatpush.bf16.msra.mxu0 0
      %221 = vmatpush.bf16.msra.mxu0 %v212
      %222 = vmatmul.bf16.gmra.mxu0 %v208
      %v223 = vpop.f32.mrf.mxu0
      %v224 = vadd.f32 0.0, %v223
      %v225 = vpop.f32.mrf.mxu0
      %226 = vdwg.mxu0
      %227 = vrot.lane.b32.xlu0 %v156, 120
      %v228 = vpop.permute.xlu0 %227
      %229 = vrot.lane.b32.xlu0 %v156, 88
      %v230 = vpop.permute.xlu0 %229
      %v231 = vsel %vm160, %v228, 0
      %v233 = vsel %vm160, %v230, 0
      %235 = vmatpush.xpose.msra.mxu0 0.0
      %236 = vmatpush.xpose.msra.mxu0 0.0
      %237 = vmatpush.xpose.msra.mxu0 0.0
      %238 = vmatpush.xpose.msra.mxu0 0.0
      %239 = vmatpush.xpose.msra.mxu0 0.0
      %240 = vmatpush.xpose.msra.mxu0 0.0
      %241 = vmatpush.xpose.msra.mxu0 0.0
      %242 = vmatpush.xpose.msra.mxu0 0.0
      %243 = vmatpush.xpose.msra.mxu0 0.0
      %244 = vmatpush.xpose.msra.mxu0 0.0
      %245 = vmatpush.xpose.msra.mxu0 0.0
      %246 = vmatpush.xpose.msra.mxu0 0.0
      %247 = vmatpush.xpose.msra.mxu0 0.0
      %248 = vmatpush.xpose.msra.mxu0 0.0
      %249 = vmatpush.xpose.msra.mxu0 0.0
      %250 = vmatpush.xpose.msra.mxu0 %v233
      %251 = vmatmul.f32.gmra.mxu0 %v231
      %v252 = vpop.f32.mrf.mxu0
      %v253 = vadd.f32 0.0, %v252
      %254 = vdwg.mxu0
      %v255 = vmul.f32 %v253, 0.35355338
      %v256 = vadd.f32 %v255, %v187
      %v257 = vsel %vm160, %v256, -inf
      %258 = vmax.xlane.f32.xlu0 %v257
      %v259 = vpop.xlane.xlu0 %258
      %v260 = vsub.f32 %v256, %v259
      %v261 = vmul.f32 %v260, 1.442695
      %v262 = vpow.pop %v261
      %v263 = vsel %vm160, %v262, 0.0
      %264 = vadd.xlane.f32.xlu0 %v263
      %v265 = vpop.xlane.xlu0 %264
      %v266 = vrcp.pop %v265
      %v267 = vmul.f32 %v262, %v266
      %v268 = vpack.c.bf16 %v267, %v267
      %269 = vrot.lane.b32.xlu0 %v204, 56
      %v270 = vpop.permute.xlu0 %269
      %v272 = vsel %vm160, %v268, 0
      %v275 = vsel %vm210, %v270, 0
      %277 = vmatpush.bf16.msra.mxu0 0
      %278 = vmatpush.bf16.msra.mxu0 0
      %279 = vmatpush.bf16.msra.mxu0 0
      %280 = vmatpush.bf16.msra.mxu0 0
      %281 = vmatpush.bf16.msra.mxu0 0
      %282 = vmatpush.bf16.msra.mxu0 0
      %283 = vmatpush.bf16.msra.mxu0 0
      %284 = vmatpush.bf16.msra.mxu0 %v275
      %285 = vmatmul.bf16.gmra.mxu0 %v272
      %v286 = vpop.f32.mrf.mxu0
      %v287 = vadd.f32 0.0, %v286
      %v288 = vpop.f32.mrf.mxu0
      %289 = vdwg.mxu0
      %290 = vrot.lane.b32.xlu0 %v156, 112
      %v291 = vpop.permute.xlu0 %290
      %292 = vrot.lane.b32.xlu0 %v156, 80
      %v293 = vpop.permute.xlu0 %292
      %v294 = vsel %vm160, %v291, 0
      %v296 = vsel %vm160, %v293, 0
      %298 = vmatpush.xpose.msra.mxu0 0.0
      %299 = vmatpush.xpose.msra.mxu0 0.0
      %300 = vmatpush.xpose.msra.mxu0 0.0
      %301 = vmatpush.xpose.msra.mxu0 0.0
      %302 = vmatpush.xpose.msra.mxu0 0.0
      %303 = vmatpush.xpose.msra.mxu0 0.0
      %304 = vmatpush.xpose.msra.mxu0 0.0
      %305 = vmatpush.xpose.msra.mxu0 0.0
      %306 = vmatpush.xpose.msra.mxu0 0.0
      %307 = vmatpush.xpose.msra.mxu0 0.0
      %308 = vmatpush.xpose.msra.mxu0 0.0
      %309 = vmatpush.xpose.msra.mxu0 0.0
      %310 = vmatpush.xpose.msra.mxu0 0.0
      %311 = vmatpush.xpose.msra.mxu0 0.0
      %312 = vmatpush.xpose.msra.mxu0 0.0
      %313 = vmatpush.xpose.msra.mxu0 %v296
      %314 = vmatmul.f32.gmra.mxu0 %v294
      %v315 = vpop.f32.mrf.mxu0
      %v316 = vadd.f32 0.0, %v315
      %317 = vdwg.mxu0
      %v318 = vmul.f32 %v316, 0.35355338
      %v319 = vadd.f32 %v318, %v187
      %v320 = vsel %vm160, %v319, -inf
      %321 = vmax.xlane.f32.xlu0 %v320
      %v322 = vpop.xlane.xlu0 %321
      %v323 = vsub.f32 %v319, %v322
      %v324 = vmul.f32 %v323, 1.442695
      %v325 = vpow.pop %v324
      %v326 = vsel %vm160, %v325, 0.0
      %327 = vadd.xlane.f32.xlu0 %v326
      %v328 = vpop.xlane.xlu0 %327
      %v329 = vrcp.pop %v328
      %v330 = vmul.f32 %v325, %v329
      %v331 = vpack.c.bf16 %v330, %v330
      %332 = vrot.lane.b32.xlu0 %v204, 48
      %v333 = vpop.permute.xlu0 %332
      %v335 = vsel %vm160, %v331, 0
      %v338 = vsel %vm210, %v333, 0
      %340 = vmatpush.bf16.msra.mxu0 0
      %341 = vmatpush.bf16.msra.mxu0 0
      %342 = vmatpush.bf16.msra.mxu0 0
      %343 = vmatpush.bf16.msra.mxu0 0
      %344 = vmatpush.bf16.msra.mxu0 0
      %345 = vmatpush.bf16.msra.mxu0 0
      %346 = vmatpush.bf16.msra.mxu0 0
      %347 = vmatpush.bf16.msra.mxu0 %v338
      %348 = vmatmul.bf16.gmra.mxu0 %v335
      %v349 = vpop.f32.mrf.mxu0
      %v350 = vadd.f32 0.0, %v349
      %v351 = vpop.f32.mrf.mxu0
      %352 = vdwg.mxu0
      %353 = vrot.lane.b32.xlu0 %v156, 104
      %v354 = vpop.permute.xlu0 %353
      %355 = vrot.lane.b32.xlu0 %v156, 72
      %v356 = vpop.permute.xlu0 %355
      %v357 = vsel %vm160, %v354, 0
      %v359 = vsel %vm160, %v356, 0
      %361 = vmatpush.xpose.msra.mxu0 0.0
      %362 = vmatpush.xpose.msra.mxu0 0.0
      %363 = vmatpush.xpose.msra.mxu0 0.0
      %364 = vmatpush.xpose.msra.mxu0 0.0
      %365 = vmatpush.xpose.msra.mxu0 0.0
      %366 = vmatpush.xpose.msra.mxu0 0.0
      %367 = vmatpush.xpose.msra.mxu0 0.0
      %368 = vmatpush.xpose.msra.mxu0 0.0
      %369 = vmatpush.xpose.msra.mxu0 0.0
      %370 = vmatpush.xpose.msra.mxu0 0.0
      %371 = vmatpush.xpose.msra.mxu0 0.0
      %372 = vmatpush.xpose.msra.mxu0 0.0
      %373 = vmatpush.xpose.msra.mxu0 0.0
      %374 = vmatpush.xpose.msra.mxu0 0.0
      %375 = vmatpush.xpose.msra.mxu0 0.0
      %376 = vmatpush.xpose.msra.mxu0 %v359
      %377 = vmatmul.f32.gmra.mxu0 %v357
      %v378 = vpop.f32.mrf.mxu0
      %v379 = vadd.f32 0.0, %v378
      %380 = vdwg.mxu0
      %v381 = vmul.f32 %v379, 0.35355338
      %v382 = vadd.f32 %v381, %v187
      %v383 = vsel %vm160, %v382, -inf
      %384 = vmax.xlane.f32.xlu0 %v383
      %v385 = vpop.xlane.xlu0 %384
      %v386 = vsub.f32 %v382, %v385
      %v387 = vmul.f32 %v386, 1.442695
      %v388 = vpow.pop %v387
      %v389 = vsel %vm160, %v388, 0.0
      %390 = vadd.xlane.f32.xlu0 %v389
      %v391 = vpop.xlane.xlu0 %390
      %v392 = vrcp.pop %v391
      %v393 = vmul.f32 %v388, %v392
      %v394 = vpack.c.bf16 %v393, %v393
      %395 = vrot.lane.b32.xlu0 %v204, 40
      %v396 = vpop.permute.xlu0 %395
      %v398 = vsel %vm160, %v394, 0
      %v401 = vsel %vm210, %v396, 0
      %403 = vmatpush.bf16.msra.mxu0 0
      %404 = vmatpush.bf16.msra.mxu0 0
      %405 = vmatpush.bf16.msra.mxu0 0
      %406 = vmatpush.bf16.msra.mxu0 0
      %407 = vmatpush.bf16.msra.mxu0 0
      %408 = vmatpush.bf16.msra.mxu0 0
      %409 = vmatpush.bf16.msra.mxu0 0
      %410 = vmatpush.bf16.msra.mxu0 %v401
      %411 = vmatmul.bf16.gmra.mxu0 %v398
      %v412 = vpop.f32.mrf.mxu0
      %v413 = vadd.f32 0.0, %v412
      %v414 = vpop.f32.mrf.mxu0
      %415 = vdwg.mxu0
      %417 = vrot.lane.b32.xlu0 %v287, 8
      %v418 = vpop.permute.xlu0 %417
      %421 = vrot.lane.b32.xlu0 %v350, 16
      %v422 = vpop.permute.xlu0 %421
      %425 = vrot.lane.b32.xlu0 %v413, 24
      %v426 = vpop.permute.xlu0 %425
      %v428 = vsel %vm160, %v224, %v418
      %vm429 = vcmask 130048
      %v430 = vsel %vm429, %v428, %v422
      %vm431 = vcmask 195584
      %v432 = vsel %vm431, %v430, %v426
      %v433 = vpack.c.bf16 %v432, %v432
      %vm434 = vcmask 257024
      %435 = vst.msk [vmem:[%s152] sm:$0xf] %vm434, %v433
      %p436 = scmp.lt.s32.totalorder %s13, 1
      %s437 = scalar_select %p436, %s13, 1
      %s438 = smul.addr %s437, 4
      %s439 = scalar_lea.vmem %s2, %s438
      // Predicated region
      $region29: #{_lambda_.14} parent=27 // pred_check
        %p440 = pneg %p83
      $region30: #{_lambda_.14} parent=27 // pred_check_branch
        %442 = sbr.rel (%p440) target = $region32
      $region31: #{_lambda_.14} parent=27 // pred_region
        _
      $region32: #{_lambda_.14} parent=27 // pred_fallthru
        _
    $region28: #{_lambda_.14} parent=5 // pred_fallthru
      _
    %p443 = scmp.le.s32.totalorder 2, %s8
    // Predicated region
    $region33: #{_lambda_.14} parent=5 // pred_check
      %p444 = pneg %p443
    $region34: #{_lambda_.14} parent=5 // pred_check_branch
      %446 = sbr.rel (%p444) target = $region36
    $region35: #{_lambda_.14} parent=5 // pred_region
      %s447 = ssub.s32 %s8, 2
      // Predicated region
      $region37: #{_lambda_.14} parent=35 // pred_check
        %p448 = pneg %p89
      $region38: #{_lambda_.14} parent=35 // pred_check_branch
        %450 = sbr.rel (%p448) target = $region40
      $region39: #{_lambda_.14} parent=35 // pred_region
        %p451 = scmp.lt.s32.totalorder %s14, 1
        %s452 = scalar_select %p451, %s14, 1
        %s453 = smul.addr %s452, 4
        %s454 = scalar_lea.vmem %s2, %s453
      $region40: #{_lambda_.14} parent=35 // pred_fallthru
        _
    $region36: #{_lambda_.14} parent=5 // pred_fallthru
      _
  $region6: #{_lambda_.14} parent=0 // loop_footer
    %s12 = sadd.s32 1, %s8
  $region7: #{_lambda_.14} parent=0 // loop_footer_branch
    %7 = sbr.rel target = $region3
  $region8: #{_lambda_.14} parent=0 // loop_exit
    _

// kernel: _lambda_.16
$region0: #{_lambda_.16}
  #allocation0 [shape = 'u32[]', space=smem, size = 0x4, offset = 0x4, fixed_abs, tag = 'smem constant byte address 0x4 - core index']
  #allocation1 [shape = 'u32[72,128]{1,0:T(1,128)}', space=vmem, size = 0x9000, scoped, tag = 'internal scratch']
  #allocation2 [shape = 'f32[16,64]{1,0:T(8,128)}', space=vmem, size = 0x2000, scoped, tag = 'scratch operand']
  %s0 = inlined_call_operand.vmem [shape: bf16[16,32], index: 0, kind: input, shape index: {}]
  %s1 = inlined_call_operand.vmem [shape: bf16[32,64], index: 1, kind: input, shape index: {}]
  %s2 = inlined_call_operand.vmem [shape: f32[1,64], index: 2, kind: input, shape index: {}]
  %s3 = inlined_call_operand.vmem [shape: bf16[16,64], index: 3, kind: output, shape index: {}]
  %s4 = sld [smem:[#allocation0]]
  $region30: #{_lambda_.16} parent=0
    _
  %s6 = ssub.s32 1, %s4
  %s7 = scalar_select 0, %s6, %s4
  // Predicated region
  $region2: #{_lambda_.16} parent=0 // pred_check
    _
  $region3: #{_lambda_.16} parent=0 // pred_check_branch
    %9 = sbr.rel (0) target = $region5
  $region4: #{_lambda_.16} parent=0 // pred_region
    _
  $region5: #{_lambda_.16} parent=0 // pred_fallthru
    _
  // Predicated region
  $region6: #{_lambda_.16} parent=0 // pred_check
    _
  $region7: #{_lambda_.16} parent=0 // pred_check_branch
    %11 = sbr.rel (0) target = $region9
  $region8: #{_lambda_.16} parent=0 // pred_region
    _
  $region9: #{_lambda_.16} parent=0 // pred_fallthru
    _
  // Predicated region
  $region10: #{_lambda_.16} parent=0 // pred_check
    _
  $region11: #{_lambda_.16} parent=0 // pred_check_branch
    %13 = sbr.rel (0) target = $region13
  $region12: #{_lambda_.16} parent=0 // pred_region
    _
  $region13: #{_lambda_.16} parent=0 // pred_fallthru
    _
  %p15 = scmp.eq.s32.totalorder 0, 0
  // Predicated region
  $region14: #{_lambda_.16} parent=0 // pred_check
    %p16 = pneg %p15
  $region15: #{_lambda_.16} parent=0 // pred_check_branch
    %18 = sbr.rel (%p16) target = $region17
  $region16: #{_lambda_.16} parent=0 // pred_region
    %vm19 = vcmask 523264
    %20 = vst.msk [vmem:[#allocation2] sm:$0xff] %vm19, 0.0
    %21 = vst.msk [vmem:[#allocation2 + $0x8] sm:$0xff] %vm19, 0.0
  $region17: #{_lambda_.16} parent=0 // pred_fallthru
    _
  %v22 = vld [vmem:[#allocation2] sm:$0xff]
  %v23 = vld [vmem:[#allocation2 + $0x8] sm:$0xff]
  %v24 = vld [vmem:[%s0] sm:$0xf]
  %v25 = vld [vmem:[%s0 + $0x4] sm:$0xf]
  %v26 = vld [vmem:[%s1] sm:$0xf]
  %v27 = vld [vmem:[%s1 + $0x4] sm:$0xf]
  %v28 = vld [vmem:[%s1 + $0x8] sm:$0xf]
  %v29 = vld [vmem:[%s1 + $0xc] sm:$0xf]
  %v32 = vunpack.c.l.b16 %v24
  %v33 = vunpack.c.l.b16 %v25
  %v34 = vpack.c.b16 %v33, %v32
  %v39 = vunpack.c.l.b16 %v26
  %v40 = vunpack.c.l.b16 %v27
  %v41 = vunpack.c.l.b16 %v28
  %v42 = vunpack.c.l.b16 %v29
  %v43 = vpack.c.b16 %v40, %v39
  %v44 = vpack.c.b16 %v42, %v41
  %vm47 = vcmask 261120
  %v49 = vsel %vm47, %v34, 0
  %51 = vmatpush.bf16.msra.mxu0 0
  %52 = vmatpush.bf16.msra.mxu0 0
  %53 = vmatpush.bf16.msra.mxu0 0
  %54 = vmatpush.bf16.msra.mxu0 0
  %55 = vmatpush.bf16.msra.mxu0 0
  %56 = vmatpush.bf16.msra.mxu0 0
  %57 = vmatpush.bf16.msra.mxu0 %v44
  %58 = vmatpush.bf16.msra.mxu0 %v43
  %59 = vmatmul.bf16.gmra.mxu0 %v49
  %v60 = vpop.f32.mrf.mxu0
  %v61 = vadd.f32 0.0, %v60
  %v62 = vpop.f32.mrf.mxu0
  %v63 = vadd.f32 0.0, %v62
  %64 = vdwg.mxu0
  %v65 = vadd.f32 %v22, %v61
  %v66 = vadd.f32 %v23, %v63
  %vm67 = vcmask 523264
  %68 = vst.msk [vmem:[#allocation2] sm:$0xff] %vm67, %v65
  %69 = vst.msk [vmem:[#allocation2 + $0x8] sm:$0xff] %vm67, %v66
  // Predicated region
  $region18: #{_lambda_.16} parent=0 // pred_check
    %p70 = pneg %p15
  $region19: #{_lambda_.16} parent=0 // pred_check_branch
    %72 = sbr.rel (%p70) target = $region21
  $region20: #{_lambda_.16} parent=0 // pred_region
    %v73 = vld [vmem:[#allocation2] sm:$0xff]
    %v74 = vld [vmem:[#allocation2 + $0x8] sm:$0xff]
    %v75 = vld [vmem:[%s2] sm:$0x1]
    %v77 = vperm.slane %v75, 0
    %v79 = vadd.f32 %v73, %v77
    %v80 = vadd.f32 %v74, %v77
    %v81 = vmul.f32 %v79, 0.5
    %v82 = vmul.f32 %v80, 0.5
    %v83 = vmul.f32 %v79, 0.70710677
    %v84 = vmul.f32 %v80, 0.70710677
    %v85 = vmul.f32 %v83, %v83
    %v86 = vmin.f32 16.0, %v85
    %v87 = vmul.f32 %v86, 2.1237322e-06
    %v88 = vadd.f32 %v87, 0.00028619796
    %v89 = vmul.f32 %v86, %v88
    %v90 = vadd.f32 %v89, 0.0036580483
    %v91 = vmul.f32 %v86, %v90
    %v92 = vadd.f32 %v91, 0.05243302
    %v93 = vmul.f32 %v86, %v92
    %v94 = vadd.f32 %v93, 0.18741608
    %v95 = vmul.f32 %v86, %v94
    %v96 = vadd.f32 %v95, 1.1283791
    %v97 = vmul.f32 %v83, %v96
    %v98 = vmul.f32 %v86, 3.8918573e-05
    %v99 = vadd.f32 %v98, 0.001143296
    %v100 = vmul.f32 %v86, %v99
    %v101 = vadd.f32 %v100, 0.014752088
    %v102 = vmul.f32 %v86, %v101
    %v103 = vadd.f32 %v102, 0.112945676
    %v104 = vmul.f32 %v86, %v103
    %v105 = vadd.f32 %v104, 0.4994258
    %v106 = vmul.f32 %v86, %v105
    %v107 = vadd.f32 %v106, 1.0
    %v108 = vrcp.pop %v107
    %v109 = vmul.f32 %v107, %v108
    %v110 = vsub.f32 1.0, %v109
    %v111 = vmul.f32 %v108, %v110
    %v112 = vadd.f32 %v108, %v111
    %vm113 = vweird.f32 %v107
    %vm114 = vweird.f32 %v108
    %vm115 = vmor %vm113, %vm114
    %v116 = vsel %vm115, %v108, %v112
    %v117 = vand.u32 2147483647, %v107
    %vm118 = vcmp.eq.f32.partialorder %v117, 8.507059e+37
    %v119 = vand.u32 %v107, 2147483648
    %v120 = vor.u32 1.1754944e-38, %v119
    %v121 = vsel %vm118, %v120, %v116
    %v122 = vmul.f32 %v97, %v121
    %v123 = vmin.f32 %v122, 1.0
    %v124 = vmax.f32 %v123, -1.0
    %v125 = vmul.f32 %v84, %v84
    %v126 = vmin.f32 16.0, %v125
    %v127 = vmul.f32 %v126, 2.1237322e-06
    %v128 = vadd.f32 %v127, 0.00028619796
    %v129 = vmul.f32 %v126, %v128
    %v130 = vadd.f32 %v129, 0.0036580483
    %v131 = vmul.f32 %v126, %v130
    %v132 = vadd.f32 %v131, 0.05243302
    %v133 = vmul.f32 %v126, %v132
    %v134 = vadd.f32 %v133, 0.18741608
    %v135 = vmul.f32 %v126, %v134
    %v136 = vadd.f32 %v135, 1.1283791
    %v137 = vmul.f32 %v84, %v136
    %v138 = vmul.f32 %v126, 3.8918573e-05
    %v139 = vadd.f32 %v138, 0.001143296
    %v140 = vmul.f32 %v126, %v139
    %v141 = vadd.f32 %v140, 0.014752088
    %v142 = vmul.f32 %v126, %v141
    %v143 = vadd.f32 %v142, 0.112945676
    %v144 = vmul.f32 %v126, %v143
    %v145 = vadd.f32 %v144, 0.4994258
    %v146 = vmul.f32 %v126, %v145
    %v147 = vadd.f32 %v146, 1.0
    %v148 = vrcp.pop %v147
    %v149 = vmul.f32 %v147, %v148
    %v150 = vsub.f32 1.0, %v149
    %v151 = vmul.f32 %v148, %v150
    %v152 = vadd.f32 %v148, %v151
    %vm153 = vweird.f32 %v147
    %vm154 = vweird.f32 %v148
    %vm155 = vmor %vm153, %vm154
    %v156 = vsel %vm155, %v148, %v152
    %v157 = vand.u32 2147483647, %v147
    %vm158 = vcmp.eq.f32.partialorder %v157, 8.507059e+37
    %v159 = vand.u32 %v147, 2147483648
    %v160 = vor.u32 1.1754944e-38, %v159
    %v161 = vsel %vm158, %v160, %v156
    %v162 = vmul.f32 %v137, %v161
    %v163 = vmin.f32 %v162, 1.0
    %v164 = vmax.f32 %v163, -1.0
    %v165 = vadd.f32 %v124, 1.0
    %v166 = vadd.f32 %v164, 1.0
    %v167 = vmul.f32 %v81, %v165
    %v168 = vmul.f32 %v82, %v166
    %v169 = vpack.c.bf16 %v167, %v167
    %v170 = vpack.c.bf16 %v168, %v168
    %vm171 = vcmask 519168
    %172 = vst.msk [vmem:[%s3] sm:$0xf] %vm171, %v169
    %173 = vst.msk [vmem:[%s3 + $0x4] sm:$0xf] %vm171, %v170
  $region21: #{_lambda_.16} parent=0 // pred_fallthru
    _
  // Predicated region
  $region22: #{_lambda_.16} parent=0 // pred_check
    _
  $region23: #{_lambda_.16} parent=0 // pred_check_branch
    %175 = sbr.rel (0) target = $region25
  $region24: #{_lambda_.16} parent=0 // pred_region
    _
  $region25: #{_lambda_.16} parent=0 // pred_fallthru
    _
  // Predicated region
  $region26: #{_lambda_.16} parent=0 // pred_check
    _
  $region27: #{_lambda_.16} parent=0 // pred_check_branch
    %177 = sbr.rel (0) target = $region29
  $region28: #{_lambda_.16} parent=0 // pred_region
    _
  $region29: #{_lambda_.16} parent=0 // pred_fallthru
    _

// kernel: _lambda_.17
$region0: #{_lambda_.17}
  #allocation0 [shape = 'u32[]', space=smem, size = 0x4, offset = 0x4, fixed_abs, tag = 'smem constant byte address 0x4 - core index']
  #allocation1 [shape = 'u32[72,128]{1,0:T(1,128)}', space=vmem, size = 0x9000, scoped, tag = 'internal scratch']
  #allocation2 [shape = 'f32[16,32]{1,0:T(8,128)}', space=vmem, size = 0x2000, scoped, tag = 'scratch operand']
  %s0 = inlined_call_operand.vmem [shape: bf16[16,64], index: 0, kind: input, shape index: {}]
  %s1 = inlined_call_operand.vmem [shape: bf16[64,32], index: 1, kind: input, shape index: {}]
  %s2 = inlined_call_operand.vmem [shape: f32[1,32], index: 2, kind: input, shape index: {}]
  %s3 = inlined_call_operand.vmem [shape: bf16[16,32], index: 3, kind: input, shape index: {}]
  %s4 = inlined_call_operand.vmem [shape: f32[1,32], index: 4, kind: input, shape index: {}]
  %s5 = inlined_call_operand.vmem [shape: f32[1,32], index: 5, kind: input, shape index: {}]
  %s6 = inlined_call_operand.vmem [shape: bf16[16,32], index: 6, kind: output, shape index: {}]
  %s7 = sld [smem:[#allocation0]]
  $region42: #{_lambda_.17} parent=0
    _
  %s9 = ssub.s32 1, %s7
  %s10 = scalar_select 0, %s9, %s7
  // Predicated region
  $region2: #{_lambda_.17} parent=0 // pred_check
    _
  $region3: #{_lambda_.17} parent=0 // pred_check_branch
    %12 = sbr.rel (0) target = $region5
  $region4: #{_lambda_.17} parent=0 // pred_region
    _
  $region5: #{_lambda_.17} parent=0 // pred_fallthru
    _
  // Predicated region
  $region6: #{_lambda_.17} parent=0 // pred_check
    _
  $region7: #{_lambda_.17} parent=0 // pred_check_branch
    %14 = sbr.rel (0) target = $region9
  $region8: #{_lambda_.17} parent=0 // pred_region
    _
  $region9: #{_lambda_.17} parent=0 // pred_fallthru
    _
  // Predicated region
  $region10: #{_lambda_.17} parent=0 // pred_check
    _
  $region11: #{_lambda_.17} parent=0 // pred_check_branch
    %16 = sbr.rel (0) target = $region13
  $region12: #{_lambda_.17} parent=0 // pred_region
    _
  $region13: #{_lambda_.17} parent=0 // pred_fallthru
    _
  // Predicated region
  $region14: #{_lambda_.17} parent=0 // pred_check
    _
  $region15: #{_lambda_.17} parent=0 // pred_check_branch
    %18 = sbr.rel (0) target = $region17
  $region16: #{_lambda_.17} parent=0 // pred_region
    _
  $region17: #{_lambda_.17} parent=0 // pred_fallthru
    _
  // Predicated region
  $region18: #{_lambda_.17} parent=0 // pred_check
    _
  $region19: #{_lambda_.17} parent=0 // pred_check_branch
    %20 = sbr.rel (0) target = $region21
  $region20: #{_lambda_.17} parent=0 // pred_region
    _
  $region21: #{_lambda_.17} parent=0 // pred_fallthru
    _
  // Predicated region
  $region22: #{_lambda_.17} parent=0 // pred_check
    _
  $region23: #{_lambda_.17} parent=0 // pred_check_branch
    %22 = sbr.rel (0) target = $region25
  $region24: #{_lambda_.17} parent=0 // pred_region
    _
  $region25: #{_lambda_.17} parent=0 // pred_fallthru
    _
  %p24 = scmp.eq.s32.totalorder 0, 0
  // Predicated region
  $region26: #{_lambda_.17} parent=0 // pred_check
    %p25 = pneg %p24
  $region27: #{_lambda_.17} parent=0 // pred_check_branch
    %27 = sbr.rel (%p25) target = $region29
  $region28: #{_lambda_.17} parent=0 // pred_region
    %vm28 = vcmask 261120
    %29 = vst.msk [vmem:[#allocation2] sm:$0xff] %vm28, 0.0
    %30 = vst.msk [vmem:[#allocation2 + $0x8] sm:$0xff] %vm28, 0.0
  $region29: #{_lambda_.17} parent=0 // pred_fallthru
    _
  %v31 = vld [vmem:[#allocation2] sm:$0xff]
  %v32 = vld [vmem:[#allocation2 + $0x8] sm:$0xff]
  %v33 = vld [vmem:[%s0] sm:$0xf]
  %v34 = vld [vmem:[%s0 + $0x4] sm:$0xf]
  %v35 = vld [vmem:[%s1] sm:$0xf]
  %v36 = vld [vmem:[%s1 + $0x4] sm:$0xf]
  %v37 = vld [vmem:[%s1 + $0x8] sm:$0xf]
  %v38 = vld [vmem:[%s1 + $0xc] sm:$0xf]
  %v39 = vld [vmem:[%s1 + $0x10] sm:$0xf]
  %v40 = vld [vmem:[%s1 + $0x14] sm:$0xf]
  %v41 = vld [vmem:[%s1 + $0x18] sm:$0xf]
  %v42 = vld [vmem:[%s1 + $0x1c] sm:$0xf]
  %v45 = vunpack.c.l.b16 %v33
  %v46 = vunpack.c.l.b16 %v34
  %v47 = vpack.c.b16 %v46, %v45
  %v56 = vunpack.c.l.b16 %v35
  %v57 = vunpack.c.l.b16 %v36
  %v58 = vunpack.c.l.b16 %v37
  %v59 = vunpack.c.l.b16 %v38
  %v60 = vunpack.c.l.b16 %v39
  %v61 = vunpack.c.l.b16 %v40
  %v62 = vunpack.c.l.b16 %v41
  %v63 = vunpack.c.l.b16 %v42
  %v64 = vpack.c.b16 %v57, %v56
  %v65 = vpack.c.b16 %v59, %v58
  %v66 = vpack.c.b16 %v61, %v60
  %v67 = vpack.c.b16 %v63, %v62
  %vm72 = vcmask 523264
  %v74 = vsel %vm72, %v47, 0
  %76 = vmatpush.bf16.msra.mxu0 0
  %77 = vmatpush.bf16.msra.mxu0 0
  %78 = vmatpush.bf16.msra.mxu0 0
  %79 = vmatpush.bf16.msra.mxu0 0
  %80 = vmatpush.bf16.msra.mxu0 %v67
  %81 = vmatpush.bf16.msra.mxu0 %v66
  %82 = vmatpush.bf16.msra.mxu0 %v65
  %83 = vmatpush.bf16.msra.mxu0 %v64
  %84 = vmatmul.bf16.gmra.mxu0 %v74
  %v85 = vpop.f32.mrf.mxu0
  %v86 = vadd.f32 0.0, %v85
  %v87 = vpop.f32.mrf.mxu0
  %v88 = vadd.f32 0.0, %v87
  %89 = vdwg.mxu0
  %v90 = vadd.f32 %v31, %v86
  %v91 = vadd.f32 %v32, %v88
  %vm92 = vcmask 261120
  %93 = vst.msk [vmem:[#allocation2] sm:$0xff] %vm92, %v90
  %94 = vst.msk [vmem:[#allocation2 + $0x8] sm:$0xff] %vm92, %v91
  // Predicated region
  $region30: #{_lambda_.17} parent=0 // pred_check
    %p95 = pneg %p24
  $region31: #{_lambda_.17} parent=0 // pred_check_branch
    %97 = sbr.rel (%p95) target = $region33
  $region32: #{_lambda_.17} parent=0 // pred_region
    %v98 = vld [vmem:[#allocation2] sm:$0xff]
    %v99 = vld [vmem:[#allocation2 + $0x8] sm:$0xff]
    %v100 = vld [vmem:[%s2] sm:$0x1]
    %v102 = vperm.slane %v100, 0
    %v104 = vadd.f32 %v98, %v102
    %v105 = vadd.f32 %v99, %v102
    %v106 = vld [vmem:[%s3] sm:$0xf]
    %v107 = vld [vmem:[%s3 + $0x4] sm:$0xf]
    %v108 = vunpack.c.l.bf16 %v106
    %v109 = vunpack.c.l.bf16 %v107
    %v110 = vadd.f32 %v104, %v108
    %v111 = vadd.f32 %v105, %v109
    %v112 = vsel %vm92, %v110, 0.0
    %113 = vadd.xlane.f32.xlu0 %v112
    %v114 = vpop.xlane.xlu0 %113
    %v115 = vsel %vm92, %v111, 0.0
    %116 = vadd.xlane.f32.xlu0 %v115
    %v117 = vpop.xlane.xlu0 %116
    %v118 = vrcp.pop 32.0
    %v119 = vmul.f32 32.0, %v118
    %v120 = vsub.f32 1.0, %v119
    %v121 = vmul.f32 %v118, %v120
    %v122 = vadd.f32 %v118, %v121
    %vm123 = vweird.f32 %v118
    %v124 = vsel %vm123, %v118, %v122
    %v125 = vmul.f32 %v114, %v124
    %v126 = vmul.f32 %v117, %v124
    %v127 = vsub.f32 %v110, %v125
    %v128 = vsub.f32 %v111, %v126
    %v129 = vmul.f32 %v127, %v127
    %v130 = vmul.f32 %v128, %v128
    %v131 = vsel %vm92, %v129, 0.0
    %132 = vadd.xlane.f32.xlu0 %v131
    %v133 = vpop.xlane.xlu0 %132
    %v134 = vsel %vm92, %v130, 0.0
    %135 = vadd.xlane.f32.xlu0 %v134
    %v136 = vpop.xlane.xlu0 %135
    %v137 = vmul.f32 %v133, %v124
    %v138 = vmul.f32 %v136, %v124
    %v139 = vadd.f32 %v137, 1e-12
    %v140 = vadd.f32 %v138, 1e-12
    %v141 = vrsqrt.pop %v139
    %v142 = vmul.f32 %v141, %v139
    %v143 = vmul.f32 %v142, %v141
    %v144 = vmul.f32 0.5, %v143
    %v145 = vsub.f32 1.5, %v144
    %v146 = vmul.f32 %v141, %v145
    %vm147 = vweird.f32 %v139
    %vm148 = vweird.f32 %v141
    %vm149 = vmor %vm147, %vm148
    %v150 = vsel %vm149, %v141, %v146
    %v151 = vrsqrt.pop %v140
    %v152 = vmul.f32 %v151, %v140
    %v153 = vmul.f32 %v152, %v151
    %v154 = vmul.f32 0.5, %v153
    %v155 = vsub.f32 1.5, %v154
    %v156 = vmul.f32 %v151, %v155
    %vm157 = vweird.f32 %v140
    %vm158 = vweird.f32 %v151
    %vm159 = vmor %vm157, %vm158
    %v160 = vsel %vm159, %v151, %v156
    %v161 = vmul.f32 %v127, %v150
    %v162 = vmul.f32 %v128, %v160
    %v163 = vld [vmem:[%s4] sm:$0x1]
    %v165 = vperm.slane %v163, 0
    %v167 = vmul.f32 %v161, %v165
    %v168 = vmul.f32 %v162, %v165
    %v169 = vld [vmem:[%s5] sm:$0x1]
    %v171 = vperm.slane %v169, 0
    %v173 = vadd.f32 %v167, %v171
    %v174 = vadd.f32 %v168, %v171
    %v175 = vpack.c.bf16 %v173, %v173
    %v176 = vpack.c.bf16 %v174, %v174
    %vm177 = vcmask 257024
    %178 = vst.msk [vmem:[%s6] sm:$0xf] %vm177, %v175
    %179 = vst.msk [vmem:[%s6 + $0x4] sm:$0xf] %vm177, %v176
  $region33: #{_lambda_.17} parent=0 // pred_fallthru
    _
  // Predicated region
  $region34: #{_lambda_.17} parent=0 // pred_check
    _
  $region35: #{_lambda_.17} parent=0 // pred_check_branch
    %181 = sbr.rel (0) target = $region37
  $region36: #{_lambda_.17} parent=0 // pred_region
    _
  $region37: #{_lambda_.17} parent=0 // pred_fallthru
    _
  // Predicated region
  $region38: #{_lambda_.17} parent=0 // pred_check
    _
  $region39: #{_lambda_.17} parent=0 // pred_check_branch
    %183 = sbr.rel (0) target = $region41
  $region40: #{_lambda_.17} parent=0 // pred_region
    _
  $region41: #{_lambda_.17} parent=0 // pred_fallthru
    _

// kernel: _lambda_.23
$region0: #{_lambda_.23}
  #allocation0 [shape = 'u32[]', space=smem, size = 0x4, offset = 0x4, fixed_abs, tag = 'smem constant byte address 0x4 - core index']
  #allocation1 [shape = 'u32[72,128]{1,0:T(1,128)}', space=vmem, size = 0x9000, scoped, tag = 'internal scratch']
  %s0 = inlined_call_operand.vmem [shape: bf16[2,32], index: 0, kind: input, shape index: {}]
  %s1 = inlined_call_operand.vmem [shape: f32[32,32], index: 1, kind: input, shape index: {}]
  %s2 = inlined_call_operand.vmem [shape: f32[1,32], index: 2, kind: input, shape index: {}]
  %s3 = inlined_call_operand.vmem [shape: f32[32,3], index: 3, kind: input, shape index: {}]
  %s4 = inlined_call_operand.vmem [shape: f32[1,3], index: 4, kind: input, shape index: {}]
  %s5 = inlined_call_operand.hbm [shape: f32[2,32], index: 5, kind: output, shape index: {0}]
  %s6 = inlined_call_operand.hbm [shape: f32[2,3], index: 6, kind: output, shape index: {1}]
  %7 = xla_tuple %s5, %s6
  %s8 = sld [smem:[#allocation0]]
  $region38: #{_lambda_.23} parent=0
    _
  %s10 = ssub.s32 1, %s8
  %s11 = scalar_select 0, %s10, %s8
  $region1: #{_lambda_.23} parent=0
    #allocation2 [shape = 'u8[1024]{0}', space=vmem, size = 0x400, scoped, tag = 'output window, operand 0, single buffered']
    #allocation3 [shape = 's32[1]{0}', space=sflag, size = 0x4, scoped, tag = 'scoped memory for _lambda_.23']
    #allocation4 [shape = 'u8[1024]{0}', space=vmem, size = 0x400, scoped, tag = 'output window, operand 1, single buffered']
    #allocation5 [shape = 's32[1]{0}', space=sflag, size = 0x4, scoped, tag = 'scoped memory for _lambda_.23']
    %12 = vsyncpa [#allocation3], 0
    %13 = vsyncpa [#allocation5], 0
    // Predicated region
    $region2: #{_lambda_.23} parent=1 // pred_check
      _
    $region3: #{_lambda_.23} parent=1 // pred_check_branch
      %15 = sbr.rel (0) target = $region5
    $region4: #{_lambda_.23} parent=1 // pred_region
      _
    $region5: #{_lambda_.23} parent=1 // pred_fallthru
      _
    // Predicated region
    $region6: #{_lambda_.23} parent=1 // pred_check
      _
    $region7: #{_lambda_.23} parent=1 // pred_check_branch
      %17 = sbr.rel (0) target = $region9
    $region8: #{_lambda_.23} parent=1 // pred_region
      _
    $region9: #{_lambda_.23} parent=1 // pred_fallthru
      _
    // Predicated region
    $region10: #{_lambda_.23} parent=1 // pred_check
      _
    $region11: #{_lambda_.23} parent=1 // pred_check_branch
      %19 = sbr.rel (0) target = $region13
    $region12: #{_lambda_.23} parent=1 // pred_region
      _
    $region13: #{_lambda_.23} parent=1 // pred_fallthru
      _
    // Predicated region
    $region14: #{_lambda_.23} parent=1 // pred_check
      _
    $region15: #{_lambda_.23} parent=1 // pred_check_branch
      %21 = sbr.rel (0) target = $region17
    $region16: #{_lambda_.23} parent=1 // pred_region
      _
    $region17: #{_lambda_.23} parent=1 // pred_fallthru
      _
    // Predicated region
    $region18: #{_lambda_.23} parent=1 // pred_check
      _
    $region19: #{_lambda_.23} parent=1 // pred_check_branch
      %23 = sbr.rel (0) target = $region21
    $region20: #{_lambda_.23} parent=1 // pred_region
      _
    $region21: #{_lambda_.23} parent=1 // pred_fallthru
      _
    %v24 = vld [vmem:[%s0] sm:$0x1]
    %v25 = vunpack.c.l.bf16 %v24
    %v26 = vld [vmem:[%s1] sm:$0xff]
    %v27 = vld [vmem:[%s1 + $0x8] sm:$0xff]
    %v28 = vld [vmem:[%s1 + $0x10] sm:$0xff]
    %v29 = vld [vmem:[%s1 + $0x18] sm:$0xff]
    %v30 = vld [vmem:[%s2] sm:$0x1]
    %v32 = vperm.slane %v30, 0
    %vm34 = vcmask 261120
    %v36 = vsel %vm34, %v25, 0
    %38 = vmatpush.msra.mxu0 0.0
    %39 = vmatpush.msra.mxu0 0.0
    %40 = vmatpush.msra.mxu0 0.0
    %41 = vmatpush.msra.mxu0 0.0
    %42 = vmatpush.msra.mxu0 0.0
    %43 = vmatpush.msra.mxu0 0.0
    %44 = vmatpush.msra.mxu0 0.0
    %45 = vmatpush.msra.mxu0 0.0
    %46 = vmatpush.msra.mxu0 0.0
    %47 = vmatpush.msra.mxu0 0.0
    %48 = vmatpush.msra.mxu0 0.0
    %49 = vmatpush.msra.mxu0 0.0
    %50 = vmatpush.msra.mxu0 %v29
    %51 = vmatpush.msra.mxu0 %v28
    %52 = vmatpush.msra.mxu0 %v27
    %53 = vmatpush.msra.mxu0 %v26
    %54 = vmatmul.f32.gmra.mxu0 %v36
    %v55 = vpop.f32.mrf.mxu0
    %v56 = vadd.f32 %v32, %v55
    %57 = vdwg.mxu0
    %v58 = vtanh.pop %v56
    %v59 = vld [vmem:[%s3] sm:$0xff]
    %v60 = vld [vmem:[%s3 + $0x8] sm:$0xff]
    %v61 = vld [vmem:[%s3 + $0x10] sm:$0xff]
    %v62 = vld [vmem:[%s3 + $0x18] sm:$0xff]
    %v63 = vld [vmem:[%s4] sm:$0x1]
    %v65 = vperm.slane %v63, 0
    %v68 = vsel %vm34, %v58, 0
    %70 = vmatpush.msra.mxu0 0.0
    %71 = vmatpush.msra.mxu0 0.0
    %72 = vmatpush.msra.mxu0 0.0
    %73 = vmatpush.msra.mxu0 0.0
    %74 = vmatpush.msra.mxu0 0.0
    %75 = vmatpush.msra.mxu0 0.0
    %76 = vmatpush.msra.mxu0 0.0
    %77 = vmatpush.msra.mxu0 0.0
    %78 = vmatpush.msra.mxu0 0.0
    %79 = vmatpush.msra.mxu0 0.0
    %80 = vmatpush.msra.mxu0 0.0
    %81 = vmatpush.msra.mxu0 0.0
    %82 = vmatpush.msra.mxu0 %v62
    %83 = vmatpush.msra.mxu0 %v61
    %84 = vmatpush.msra.mxu0 %v60
    %85 = vmatpush.msra.mxu0 %v59
    %86 = vmatmul.f32.gmra.mxu0 %v68
    %v87 = vpop.f32.mrf.mxu0
    %v88 = vadd.f32 %v65, %v87
    %89 = vdwg.mxu0
    %vm90 = vcmask 254976
    %91 = vst.msk [vmem:[#allocation2] sm:$0x3] %vm90, %v58
    %vm92 = vcmask 17408
    %93 = vst.msk [vmem:[#allocation4] sm:$0x3] %vm92, %v88
    // Predicated region
    $region22: #{_lambda_.23} parent=1 // pred_check
      _
    $region23: #{_lambda_.23} parent=1 // pred_check_branch
      %95 = sbr.rel (0) target = $region25
    $region24: #{_lambda_.23} parent=1 // pred_region
      %97 = vsyncadd [#allocation3], 0
      %s99 = sshll.u32 [#allocation2], 4
      %s100 = int_to_ptr.vmem [resolvable:$true] %s99
      %s101 = sshll.u32 %s5, 4
      %s102 = int_to_ptr.hbm [resolvable:$true] %s101
      %104 = dma.vmem_to_hbm [thread:$0]  %s100, 32, %s102, [#allocation3]
    $region25: #{_lambda_.23} parent=1 // pred_fallthru
      _
    // Predicated region
    $region26: #{_lambda_.23} parent=1 // pred_check
      _
    $region27: #{_lambda_.23} parent=1 // pred_check_branch
      %106 = sbr.rel (0) target = $region29
    $region28: #{_lambda_.23} parent=1 // pred_region
      %108 = vsyncadd [#allocation5], 0
      %s110 = sshll.u32 [#allocation4], 4
      %s111 = int_to_ptr.vmem [resolvable:$true] %s110
      %s112 = sshll.u32 %s6, 4
      %s113 = int_to_ptr.hbm [resolvable:$true] %s112
      %115 = dma.vmem_to_hbm [thread:$0]  %s111, 32, %s113, [#allocation5]
    $region29: #{_lambda_.23} parent=1 // pred_fallthru
      _
    // Predicated region
    $region30: #{_lambda_.23} parent=1 // pred_check
      _
    $region31: #{_lambda_.23} parent=1 // pred_check_branch
      %117 = sbr.rel (0) target = $region33
    $region32: #{_lambda_.23} parent=1 // pred_region
      %119 = dma.done [#allocation3], 32
    $region33: #{_lambda_.23} parent=1 // pred_fallthru
      _
    // Predicated region
    $region34: #{_lambda_.23} parent=1 // pred_check
      _
    $region35: #{_lambda_.23} parent=1 // pred_check_branch
      %121 = sbr.rel (0) target = $region37
    $region36: #{_lambda_.23} parent=1 // pred_region
      %123 = dma.done [#allocation5], 32
    $region37: #{_lambda_.23} parent=1 // pred_fallthru
      _
    %124 = vsyncpa [#allocation3], 1
    %125 = vsyncpa [#allocation5], 1

</llo_original>
